<compile_context>
chip_gen: v7x
topology: tpu7x:2x2x1
jax: 0.10.0
libtpu: 0.0.40
codegen_flags: <defaults>
</compile_context>

<pallas_src>
import math
import functools

import numpy as np
import jax
import jax.numpy as jnp
from jax.experimental import pallas as pl
from jax.experimental.pallas import tpu as pltpu

MASK_BIAS = 1e9  # additive bias magnitude for masked-out score positions


# --------------------------------- kernel ----------------------------------- #

def _mha_flash_kernel(*refs, h, dk, causal, has_mask):
    if has_mask:
        (xq_ref, xkv_ref, mask_ref, wq_ref, bq_ref, wkv_ref, bkv_ref,
         wo_ref, bo_ref, o_ref, q_scr, m_scr, l_scr, acc_scr) = refs
    else:
        (xq_ref, xkv_ref, wq_ref, bq_ref, wkv_ref, bkv_ref,
         wo_ref, bo_ref, o_ref, q_scr, m_scr, l_scr, acc_scr) = refs
        mask_ref = None

    qi = pl.program_id(1)
    si = pl.program_id(2)
    cdt = wq_ref.dtype
    tq = xq_ref.shape[0]
    ts = xkv_ref.shape[0]
    D = h * dk

    # ---- once per (b, qi) query tile: project Q (scale pre-folded into Wq/bq),
    #      split heads into scratch, reset the online-softmax state ------------
    @pl.when(si == 0)
    def _init():
        q = (jnp.dot(xq_ref[...], wq_ref[...],
                     preferred_element_type=jnp.float32) + bq_ref[...]).astype(cdt)
        for i in range(h):                                # static unroll over heads
            q_scr[i] = q[:, i * dk:(i + 1) * dk]
        m_scr[...] = jnp.full(m_scr.shape, -jnp.inf, jnp.float32)
        l_scr[...] = jnp.zeros(l_scr.shape, jnp.float32)
        acc_scr[...] = jnp.zeros(acc_scr.shape, jnp.float32)

    # ---- fused K|V projection of this KV tile: one (D, 2D) MXU pass ----------
    kv = jnp.dot(xkv_ref[...], wkv_ref[...],
                 preferred_element_type=jnp.float32) + bkv_ref[...]

    # ---- additive mask bias for this (tq, ts) tile (f32, never (B, Tq, S)) ---
    bias = None
    if has_mask:
        bias = (mask_ref[...] - 1.0) * MASK_BIAS          # (1, ts) or (tq, ts)
    if causal:
        row = qi * tq + jax.lax.broadcasted_iota(jnp.int32, (tq, ts), 0)
        col = si * ts + jax.lax.broadcasted_iota(jnp.int32, (tq, ts), 1)
        cb = jnp.where(row >= col, jnp.float32(0.0), jnp.float32(-MASK_BIAS))
        bias = cb if bias is None else bias + cb

    # ---- online-softmax update, one head at a time (static unroll) -----------
    # TODO(synk): batch all heads in one dot_general ('hqd,hkd->hqk') so the
    # head-split relayout is paid once instead of 2h lane slices per step.
    for i in range(h):
        kh = kv[:, i * dk:(i + 1) * dk].astype(cdt)               # (ts, dk)
        vh = kv[:, D + i * dk:D + (i + 1) * dk].astype(cdt)       # (ts, dk)
        s = jax.lax.dot_general(q_scr[i], kh, (((1,), (1,)), ((), ())),
                                preferred_element_type=jnp.float32)  # (tq, ts)
        if bias is not None:
            s = s + bias
        m_prev = m_scr[i]                                          # (tq, 1)
        m_new = jnp.maximum(m_prev, jnp.max(s, axis=-1, keepdims=True))
        alpha = jnp.exp(m_prev - m_new)
        p = jnp.exp(s - m_new)
        l_scr[i] = alpha * l_scr[i] + jnp.sum(p, axis=-1, keepdims=True)
        acc_scr[i] = alpha * acc_scr[i] + jnp.dot(
            p.astype(cdt), vh, preferred_element_type=jnp.float32)
        m_scr[i] = m_new

    # ---- last KV step: normalize and accumulate head contexts straight into
    #      the output projection (no head concat / relayout) -------------------
    @pl.when(si == pl.num_programs(2) - 1)
    def _finalize():
        out = bo_ref[...]                                          # (1, D) f32
        for i in range(h):
            ctx = acc_scr[i] * pl.reciprocal(l_scr[i], approx=True)
            out = out + jnp.dot(ctx.astype(cdt), wo_ref[i],
                                preferred_element_type=jnp.float32)
        o_ref[...] = out.astype(o_ref.dtype)


# --------------------------------- wrapper ----------------------------------- #

def _pick_tile(n, pref):
    """Largest tile <= pref that divides n and keeps the sublane dim aligned."""
    pref = max(1, min(pref, n))
    if n % pref == 0:
        return pref
    for t in range(pref, 0, -1):
        if n % t == 0 and (t % 8 == 0 or t == n):
            return t
    return n


def multi_headed_attention(query, key, value, mask, params, h, *,
                           causal=False, use_bf16=True, q_tile=128, kv_tile=512):
    """Forward pass of MultiHeadedAttention (dropout = identity / eval mode).

    query: (B, Tq, D); key/value: (B, S, D) and must be the same tensor (as in
    standard self / cross attention); mask: None, (Tq, S), (B, 1, S) or
    (B, Tq, S) with {0, 1} entries. causal=True adds an in-kernel causal mask.
    params: dict 'q','k','v','o' -> {'w': (D, D), 'b': (D,)}.
    """
    if key is not value:
        # TODO(synk): add a non-fused K/V path for distinct key/value tensors.
        raise NotImplementedError("key and value must be the same tensor")

    B, Tq, D = query.shape
    S = key.shape[1]
    assert D % h == 0
    dk = D // h
    scale = 1.0 / math.sqrt(dk)

    tq = _pick_tile(Tq, q_tile)
    ts = _pick_tile(S, kv_tile)

    has_mask = mask is not None
    if has_mask:
        m = mask.astype(jnp.float32)
        if m.ndim == 2:
            m = m[None]
        # The mask is tiled along S by the BlockSpec, so its lane-dim block must
        # be a multiple of 128 or the full S.
        if ts != S and ts % 128 != 0:
            ts = S
        if m.shape[1] == 1:                        # padding mask, broadcast in-kernel
            m = jnp.broadcast_to(m, (B, 1, S))
            mask_specs = [pl.BlockSpec((None, 1, ts), lambda b, i, j: (b, 0, j))]
        else:                                      # general full-rank mask fallback
            m = jnp.broadcast_to(m, (B, Tq, S))
            mask_specs = [pl.BlockSpec((None, tq, ts), lambda b, i, j: (b, i, j))]
        mask_args = [m]
    else:
        mask_specs, mask_args = [], []

    nq, ns = Tq // tq, S // ts

    # bf16 matmul operands halve HBM/VMEM traffic and double the MXU rate on
    # v5e/v6e/v7x; mask / softmax / accumulation stay in f32.
    cdt = jnp.bfloat16 if use_bf16 else jnp.float32

    # Fold 1/sqrt(dk) into the Q projection once (outside the hot loop).
    wq = (params['q']['w'] * scale).astype(cdt)
    bq = (params['q']['b'] * scale).astype(jnp.float32).reshape(1, D)
    # Fused K|V projection: one (D, 2D) weight; the memory tile is DMA'd once.
    wkv = jnp.concatenate([params['k']['w'], params['v']['w']], axis=1).astype(cdt)
    bkv = jnp.concatenate([params['k']['b'], params['v']['b']],
                          axis=0).astype(jnp.float32).reshape(1, 2 * D)
    # Wo split per head so head contexts accumulate straight into the output.
    wo = params['o']['w'].reshape(h, dk, D).astype(cdt)
    bo = params['o']['b'].astype(jnp.float32).reshape(1, D)

    def _const(shape):
        zeros = (0,) * len(shape)
        return pl.BlockSpec(shape, lambda b, i, j: zeros)

    in_specs = ([pl.BlockSpec((None, tq, D), lambda b, i, j: (b, i, 0)),   # query rows
                 pl.BlockSpec((None, ts, D), lambda b, i, j: (b, j, 0))]   # memory rows
                + mask_specs
                + [_const((D, D)), _const((1, D)),             # Wq (scaled), bq
                   _const((D, 2 * D)), _const((1, 2 * D)),     # fused W_kv, b_kv
                   _const((h, dk, D)), _const((1, D))])        # Wo (per head), bo

    csz = 2 if use_bf16 else 4
    buf_bytes = (2 * (tq + ts) * D * csz                  # double-buffered activations
                 + 2 * tq * D * 4                         # output tile
                 + 2 * (4 * D * D * csz + 4 * D * 4)      # weights + biases
                 + h * tq * (dk * (csz + 4) + 8)          # q/acc/m/l scratch
                 + (2 * tq * ts * 4 if has_mask else 0))  # mask tile
    vmem_limit = int(min(112 * (1 << 20), max(32 * (1 << 20), 2 * buf_bytes)))

    kernel = functools.partial(_mha_flash_kernel, h=h, dk=dk,
                               causal=causal, has_mask=has_mask)
    return pl.pallas_call(
        kernel,
        out_shape=jax.ShapeDtypeStruct((B, Tq, D), jnp.float32),
        grid=(B, nq, ns),
        in_specs=in_specs,
        out_specs=pl.BlockSpec((None, tq, D), lambda b, i, j: (b, i, 0)),
        scratch_shapes=[
            pltpu.VMEM((h, tq, dk), cdt),           # projected Q, head-major
            pltpu.VMEM((h, tq, 1), jnp.float32),    # running row max
            pltpu.VMEM((h, tq, 1), jnp.float32),    # running softmax denom
            pltpu.VMEM((h, tq, dk), jnp.float32),   # running context accumulator
        ],
        compiler_params=pltpu.CompilerParams(
            dimension_semantics=("parallel", "parallel", "arbitrary"),
            vmem_limit_bytes=vmem_limit),
    )(query.astype(cdt), key.astype(cdt), *mask_args, wq, bq, wkv, bkv, wo, bo)


# ------------------------- deterministic parameters -------------------------- #

def init_params(rng, d_model):
    keys = jax.random.split(rng, 8)

    def lin(kw, kb):
        return {'w': jax.random.normal(kw, (d_model, d_model), jnp.float32) * 0.05,
                'b': jax.random.normal(kb, (d_model,), jnp.float32) * 0.01}

    names = ('q', 'k', 'v', 'o')
    return {n: lin(keys[2 * i], keys[2 * i + 1]) for i, n in enumerate(names)}


# ----------------------------- pure-JAX reference ----------------------------- #

def _ref_mha(query, key, value, mask, p, h):
    """Mirrors the PyTorch module in f32 (masked_fill(-inf) ~ additive -1e9)."""
    B, Tq, D = query.shape
    S = key.shape[1]
    dk = D // h

    def lin(x, l):
        return x @ l['w'] + l['b']

    q = lin(query, p['q']).reshape(B, Tq, h, dk).transpose(0, 2, 1, 3)
    k = lin(key, p['k']).reshape(B, S, h, dk).transpose(0, 2, 1, 3)
    v = lin(value, p['v']).reshape(B, S, h, dk).transpose(0, 2, 1, 3)
    scores = jnp.einsum('bhtd,bhsd->bhts', q, k) / math.sqrt(dk)
    if mask is not None:
        m = jnp.broadcast_to(mask, (B, Tq, S))[:, None, :, :]
        scores = jnp.where(m == 0, -MASK_BIAS, scores)
    pa = jax.nn.softmax(scores, axis=-1)
    ctx = jnp.einsum('bhts,bhsd->bhtd', pa, v).transpose(0, 2, 1, 3).reshape(B, Tq, D)
    return lin(ctx, p['o'])


# ----------------------------------- main ------------------------------------ #

if __name__ == "__main__":
    B, T, S, D, H = 2, 16, 24, 32, 4

    rng = jax.random.PRNGKey(0)
    kx, km, kp = jax.random.split(rng, 3)
    x = jax.random.normal(kx, (B, T, D), jnp.float32)        # decoder-side activations
    memory = jax.random.normal(km, (B, S, D), jnp.float32)   # cross-attention memory
    params = init_params(kp, D)

    tril = jnp.tril(jnp.ones((T, T), jnp.float32))
    ref_self = _ref_mha(x, x, x, tril[None], params, H)

    # 1) causal self-attention, mask generated in-kernel (zero mask DMA);
    #    2x2 query/KV tiling exercises the multi-step online-softmax state.
    out_causal = jax.block_until_ready(
        multi_headed_attention(x, x, x, None, params, H, causal=True,
                               use_bf16=False, q_tile=8, kv_tile=8))
    np.testing.assert_allclose(np.asarray(out_causal), np.asarray(ref_self),
                               atol=2e-3, rtol=2e-3)

    # 2) same computation through the explicit full-rank (B, Tq, S) mask path
    out_full = jax.block_until_ready(
        multi_headed_attention(x, x, x, jnp.broadcast_to(tril, (B, T, T)),
                               params, H, use_bf16=False, q_tile=8, kv_tile=8))
    np.testing.assert_allclose(np.asarray(out_full), np.asarray(ref_self),
                               atol=2e-3, rtol=2e-3)

    # 3) cross-attention over memory with a (B, 1, S) padding mask
    src_mask = jnp.ones((B, 1, S), jnp.float32).at[:, :, S - 5:].set(0.0)
    out_cross = jax.block_until_ready(
        multi_headed_attention(x, memory, memory, src_mask, params, H,
                               use_bf16=False, q_tile=8, kv_tile=8))
    ref_cross = _ref_mha(x, memory, memory, src_mask, params, H)
    np.testing.assert_allclose(np.asarray(out_cross), np.asarray(ref_cross),
                               atol=2e-3, rtol=2e-3)

    # 4) bf16 MXU-operand path (the default) with the in-kernel causal mask
    out_bf16 = jax.block_until_ready(
        multi_headed_attention(x, x, x, None, params, H, causal=True,
                               q_tile=8, kv_tile=8))
    np.testing.assert_allclose(np.asarray(out_bf16), np.asarray(ref_self),
                               atol=3e-2, rtol=3e-2)

    print("KERNEL_OK")
</pallas_src>

<mosaic_0001>
module attributes {stable_mosaic.version = 11 : i64} {
  func.func @_mha_flash_kernel(%arg0: i32, %arg1: i32, %arg2: i32, %arg3: memref<1x8x32xf32, #tpu.memory_space<vmem>>, %arg4: memref<1x8x32xf32, #tpu.memory_space<vmem>>, %arg5: memref<32x32xf32, #tpu.memory_space<vmem>>, %arg6: memref<1x32xf32, #tpu.memory_space<vmem>>, %arg7: memref<32x64xf32, #tpu.memory_space<vmem>>, %arg8: memref<1x64xf32, #tpu.memory_space<vmem>>, %arg9: memref<4x8x32xf32, #tpu.memory_space<vmem>>, %arg10: memref<1x32xf32, #tpu.memory_space<vmem>>, %arg11: memref<1x8x32xf32, #tpu.memory_space<vmem>>, %arg12: memref<4x8x8xf32, #tpu.memory_space<vmem>>, %arg13: memref<4x8x1xf32, #tpu.memory_space<vmem>>, %arg14: memref<4x8x1xf32, #tpu.memory_space<vmem>>, %arg15: memref<4x8x8xf32, #tpu.memory_space<vmem>>) attributes {dimension_semantics = [#tpu.dimension_semantics<parallel>, #tpu.dimension_semantics<parallel>, #tpu.dimension_semantics<arbitrary>], iteration_bounds = array<i64: 2, 2, 2>, scalar_prefetch = 0 : i64, scratch_operands = 4 : i64, tpu.core_type = #tpu.core_type<tc>, window_params = [{transform_indices = @transform_0, window_bounds = array<i64: 1, 8, 32>}, {transform_indices = @transform_1, window_bounds = array<i64: 1, 8, 32>}, {pipeline_mode = #tpu.pipeline_mode<synchronous>, transform_indices = @transform_2, window_bounds = array<i64: 32, 32>}, {pipeline_mode = #tpu.pipeline_mode<synchronous>, transform_indices = @transform_3, window_bounds = array<i64: 1, 32>}, {pipeline_mode = #tpu.pipeline_mode<synchronous>, transform_indices = @transform_4, window_bounds = array<i64: 32, 64>}, {pipeline_mode = #tpu.pipeline_mode<synchronous>, transform_indices = @transform_5, window_bounds = array<i64: 1, 64>}, {pipeline_mode = #tpu.pipeline_mode<synchronous>, transform_indices = @transform_6, window_bounds = array<i64: 4, 8, 32>}, {pipeline_mode = #tpu.pipeline_mode<synchronous>, transform_indices = @transform_7, window_bounds = array<i64: 1, 32>}, {transform_indices = @transform_8, window_bounds = array<i64: 1, 8, 32>}]} {
    %c0_i32 = arith.constant 0 : i32
    %0 = arith.cmpi eq, %arg2, %c0_i32 : i32
    %1 = arith.extui %0 : i1 to i32
    %c0_i32_0 = arith.constant 0 : i32
    %2 = arith.cmpi ne, %1, %c0_i32_0 : i32
    scf.if %2 {
      %c0_108 = arith.constant 0 : index
      %c0_109 = arith.constant 0 : index
      %c0_110 = arith.constant 0 : index
      %173 = vector.load %arg3[%c0_108, %c0_109, %c0_110] : memref<1x8x32xf32, #tpu.memory_space<vmem>>, vector<1x8x32xf32>
      %174 = vector.shape_cast %173 : vector<1x8x32xf32> to vector<8x32xf32>
      %c0_111 = arith.constant 0 : index
      %c0_112 = arith.constant 0 : index
      %175 = vector.load %arg5[%c0_111, %c0_112] : memref<32x32xf32, #tpu.memory_space<vmem>>, vector<32x32xf32>
      %cst_113 = arith.constant dense<0.000000e+00> : vector<8x32xf32>
      %176 = tpu.matmul %174, %175, %cst_113 {dimension_numbers = #tpu.dot_dimension_numbers<[1], [0], [0], [1], [0, 0, 1, 1], [], []>} : vector<8x32xf32>, vector<32x32xf32>, vector<8x32xf32> -> vector<8x32xf32>
      %c0_114 = arith.constant 0 : index
      %c0_115 = arith.constant 0 : index
      %177 = vector.load %arg6[%c0_114, %c0_115] : memref<1x32xf32, #tpu.memory_space<vmem>>, vector<1x32xf32>
      %178 = vector.broadcast %177 : vector<1x32xf32> to vector<8x32xf32>
      %179 = arith.addf %176, %178 : vector<8x32xf32>
      %180 = vector.extract_strided_slice %179 {offsets = [0, 0], sizes = [8, 8], strides = [1, 1]} : vector<8x32xf32> to vector<8x8xf32>
      %c0_116 = arith.constant 0 : index
      %c0_117 = arith.constant 0 : index
      %c0_118 = arith.constant 0 : index
      %181 = vector.load %arg12[%c0_116, %c0_117, %c0_118] : memref<4x8x8xf32, #tpu.memory_space<vmem>>, vector<1x8x8xf32>
      %182 = vector.shape_cast %181 : vector<1x8x8xf32> to vector<8x8xf32>
      %183 = vector.shape_cast %180 : vector<8x8xf32> to vector<1x8x8xf32>
      tpu.vector_store %arg12[%c0_116, %c0_117, %c0_118], %183 {strides = array<i32>} : memref<4x8x8xf32, #tpu.memory_space<vmem>>, vector<1x8x8xf32>,
      %184 = vector.extract_strided_slice %179 {offsets = [0, 8], sizes = [8, 8], strides = [1, 1]} : vector<8x32xf32> to vector<8x8xf32>
      %c1_119 = arith.constant 1 : index
      %c0_120 = arith.constant 0 : index
      %c0_121 = arith.constant 0 : index
      %185 = vector.load %arg12[%c1_119, %c0_120, %c0_121] : memref<4x8x8xf32, #tpu.memory_space<vmem>>, vector<1x8x8xf32>
      %186 = vector.shape_cast %185 : vector<1x8x8xf32> to vector<8x8xf32>
      %187 = vector.shape_cast %184 : vector<8x8xf32> to vector<1x8x8xf32>
      tpu.vector_store %arg12[%c1_119, %c0_120, %c0_121], %187 {strides = array<i32>} : memref<4x8x8xf32, #tpu.memory_space<vmem>>, vector<1x8x8xf32>,
      %188 = vector.extract_strided_slice %179 {offsets = [0, 16], sizes = [8, 8], strides = [1, 1]} : vector<8x32xf32> to vector<8x8xf32>
      %c2_122 = arith.constant 2 : index
      %c0_123 = arith.constant 0 : index
      %c0_124 = arith.constant 0 : index
      %189 = vector.load %arg12[%c2_122, %c0_123, %c0_124] : memref<4x8x8xf32, #tpu.memory_space<vmem>>, vector<1x8x8xf32>
      %190 = vector.shape_cast %189 : vector<1x8x8xf32> to vector<8x8xf32>
      %191 = vector.shape_cast %188 : vector<8x8xf32> to vector<1x8x8xf32>
      tpu.vector_store %arg12[%c2_122, %c0_123, %c0_124], %191 {strides = array<i32>} : memref<4x8x8xf32, #tpu.memory_space<vmem>>, vector<1x8x8xf32>,
      %192 = vector.extract_strided_slice %179 {offsets = [0, 24], sizes = [8, 8], strides = [1, 1]} : vector<8x32xf32> to vector<8x8xf32>
      %c3_125 = arith.constant 3 : index
      %c0_126 = arith.constant 0 : index
      %c0_127 = arith.constant 0 : index
      %193 = vector.load %arg12[%c3_125, %c0_126, %c0_127] : memref<4x8x8xf32, #tpu.memory_space<vmem>>, vector<1x8x8xf32>
      %194 = vector.shape_cast %193 : vector<1x8x8xf32> to vector<8x8xf32>
      %195 = vector.shape_cast %192 : vector<8x8xf32> to vector<1x8x8xf32>
      tpu.vector_store %arg12[%c3_125, %c0_126, %c0_127], %195 {strides = array<i32>} : memref<4x8x8xf32, #tpu.memory_space<vmem>>, vector<1x8x8xf32>,
      %cst_128 = arith.constant 0xFF800000 : f32
      %196 = vector.broadcast %cst_128 : f32 to vector<4x8x1xf32>
      %c0_129 = arith.constant 0 : index
      %c0_130 = arith.constant 0 : index
      %c0_131 = arith.constant 0 : index
      %197 = vector.load %arg13[%c0_129, %c0_130, %c0_131] : memref<4x8x1xf32, #tpu.memory_space<vmem>>, vector<4x8x1xf32>
      tpu.vector_store %arg13[%c0_129, %c0_130, %c0_131], %196 {strides = array<i32>} : memref<4x8x1xf32, #tpu.memory_space<vmem>>, vector<4x8x1xf32>,
      %cst_132 = arith.constant 0.000000e+00 : f32
      %198 = vector.broadcast %cst_132 : f32 to vector<4x8x1xf32>
      %c0_133 = arith.constant 0 : index
      %c0_134 = arith.constant 0 : index
      %c0_135 = arith.constant 0 : index
      %199 = vector.load %arg14[%c0_133, %c0_134, %c0_135] : memref<4x8x1xf32, #tpu.memory_space<vmem>>, vector<4x8x1xf32>
      tpu.vector_store %arg14[%c0_133, %c0_134, %c0_135], %198 {strides = array<i32>} : memref<4x8x1xf32, #tpu.memory_space<vmem>>, vector<4x8x1xf32>,
      %cst_136 = arith.constant 0.000000e+00 : f32
      %200 = vector.broadcast %cst_136 : f32 to vector<4x8x8xf32>
      %c0_137 = arith.constant 0 : index
      %c0_138 = arith.constant 0 : index
      %c0_139 = arith.constant 0 : index
      %201 = vector.load %arg15[%c0_137, %c0_138, %c0_139] : memref<4x8x8xf32, #tpu.memory_space<vmem>>, vector<4x8x8xf32>
      tpu.vector_store %arg15[%c0_137, %c0_138, %c0_139], %200 {strides = array<i32>} : memref<4x8x8xf32, #tpu.memory_space<vmem>>, vector<4x8x8xf32>,
    } else {
    }
    %c0 = arith.constant 0 : index
    %c0_1 = arith.constant 0 : index
    %c0_2 = arith.constant 0 : index
    %3 = vector.load %arg4[%c0, %c0_1, %c0_2] : memref<1x8x32xf32, #tpu.memory_space<vmem>>, vector<1x8x32xf32>
    %4 = vector.shape_cast %3 : vector<1x8x32xf32> to vector<8x32xf32>
    %c0_3 = arith.constant 0 : index
    %c0_4 = arith.constant 0 : index
    %5 = vector.load %arg7[%c0_3, %c0_4] : memref<32x64xf32, #tpu.memory_space<vmem>>, vector<32x64xf32>
    %cst = arith.constant dense<0.000000e+00> : vector<8x64xf32>
    %6 = tpu.matmul %4, %5, %cst {dimension_numbers = #tpu.dot_dimension_numbers<[1], [0], [0], [1], [0, 0, 1, 1], [], []>} : vector<8x32xf32>, vector<32x64xf32>, vector<8x64xf32> -> vector<8x64xf32>
    %c0_5 = arith.constant 0 : index
    %c0_6 = arith.constant 0 : index
    %7 = vector.load %arg8[%c0_5, %c0_6] : memref<1x64xf32, #tpu.memory_space<vmem>>, vector<1x64xf32>
    %8 = vector.broadcast %7 : vector<1x64xf32> to vector<8x64xf32>
    %9 = arith.addf %6, %8 : vector<8x64xf32>
    %c8_i32 = arith.constant 8 : i32
    %10 = arith.muli %arg1, %c8_i32 : i32
    %11 = tpu.iota {dimensions = array<i32: 0>} : vector<8x8xi32>
    %12 = vector.broadcast %10 : i32 to vector<8x8xi32>
    %13 = arith.addi %12, %11 : vector<8x8xi32>
    %c8_i32_7 = arith.constant 8 : i32
    %14 = arith.muli %arg2, %c8_i32_7 : i32
    %15 = tpu.iota {dimensions = array<i32: 1>} : vector<8x8xi32>
    %16 = vector.broadcast %14 : i32 to vector<8x8xi32>
    %17 = arith.addi %16, %15 : vector<8x8xi32>
    %18 = arith.cmpi sge, %13, %17 : vector<8x8xi32>
    %cst_8 = arith.constant 0.000000e+00 : f32
    %cst_9 = arith.constant -1.000000e+09 : f32
    %19 = vector.broadcast %cst_8 : f32 to vector<8x8xf32>
    %20 = vector.broadcast %cst_9 : f32 to vector<8x8xf32>
    %21 = arith.select %18, %19, %20 : vector<8x8xi1>, vector<8x8xf32>
    %22 = vector.extract_strided_slice %9 {offsets = [0, 0], sizes = [8, 8], strides = [1, 1]} : vector<8x64xf32> to vector<8x8xf32>
    %23 = vector.extract_strided_slice %9 {offsets = [0, 32], sizes = [8, 8], strides = [1, 1]} : vector<8x64xf32> to vector<8x8xf32>
    %c0_10 = arith.constant 0 : index
    %c0_11 = arith.constant 0 : index
    %c0_12 = arith.constant 0 : index
    %24 = vector.load %arg12[%c0_10, %c0_11, %c0_12] : memref<4x8x8xf32, #tpu.memory_space<vmem>>, vector<1x8x8xf32>
    %25 = vector.shape_cast %24 : vector<1x8x8xf32> to vector<8x8xf32>
    %cst_13 = arith.constant dense<0.000000e+00> : vector<8x8xf32>
    %26 = tpu.matmul %25, %22, %cst_13 {dimension_numbers = #tpu.dot_dimension_numbers<[1], [1], [0], [0], [0, 0, 1, 0], [], []>} : vector<8x8xf32>, vector<8x8xf32>, vector<8x8xf32> -> vector<8x8xf32>
    %27 = arith.addf %26, %21 : vector<8x8xf32>
    %c0_14 = arith.constant 0 : index
    %c0_15 = arith.constant 0 : index
    %c0_16 = arith.constant 0 : index
    %28 = vector.load %arg13[%c0_14, %c0_15, %c0_16] : memref<4x8x1xf32, #tpu.memory_space<vmem>>, vector<1x8x1xf32>
    %29 = vector.shape_cast %28 : vector<1x8x1xf32> to vector<8x1xf32>
    %cst_17 = arith.constant dense<0xFF800000> : vector<8xf32>
    %30 = vector.multi_reduction <maximumf>, %27, %cst_17 [1] : vector<8x8xf32> to vector<8xf32>
    %31 = vector.shape_cast %30 : vector<8xf32> to vector<8x1xf32>
    %32 = arith.maximumf %29, %31 : vector<8x1xf32>
    %33 = arith.subf %29, %32 : vector<8x1xf32>
    %34 = math.exp %33 : vector<8x1xf32>
    %35 = vector.broadcast %32 : vector<8x1xf32> to vector<8x8xf32>
    %36 = arith.subf %27, %35 : vector<8x8xf32>
    %37 = math.exp %36 : vector<8x8xf32>
    %c0_18 = arith.constant 0 : index
    %c0_19 = arith.constant 0 : index
    %c0_20 = arith.constant 0 : index
    %38 = vector.load %arg14[%c0_18, %c0_19, %c0_20] : memref<4x8x1xf32, #tpu.memory_space<vmem>>, vector<1x8x1xf32>
    %39 = vector.shape_cast %38 : vector<1x8x1xf32> to vector<8x1xf32>
    %40 = arith.mulf %34, %39 : vector<8x1xf32>
    %cst_21 = arith.constant dense<0.000000e+00> : vector<8xf32>
    %41 = vector.multi_reduction <add>, %37, %cst_21 [1] : vector<8x8xf32> to vector<8xf32>
    %42 = vector.shape_cast %41 : vector<8xf32> to vector<8x1xf32>
    %43 = arith.addf %40, %42 : vector<8x1xf32>
    %c0_22 = arith.constant 0 : index
    %c0_23 = arith.constant 0 : index
    %c0_24 = arith.constant 0 : index
    %44 = vector.load %arg14[%c0_22, %c0_23, %c0_24] : memref<4x8x1xf32, #tpu.memory_space<vmem>>, vector<1x8x1xf32>
    %45 = vector.shape_cast %44 : vector<1x8x1xf32> to vector<8x1xf32>
    %46 = vector.shape_cast %43 : vector<8x1xf32> to vector<1x8x1xf32>
    tpu.vector_store %arg14[%c0_22, %c0_23, %c0_24], %46 {strides = array<i32>} : memref<4x8x1xf32, #tpu.memory_space<vmem>>, vector<1x8x1xf32>,
    %c0_25 = arith.constant 0 : index
    %c0_26 = arith.constant 0 : index
    %c0_27 = arith.constant 0 : index
    %47 = vector.load %arg15[%c0_25, %c0_26, %c0_27] : memref<4x8x8xf32, #tpu.memory_space<vmem>>, vector<1x8x8xf32>
    %48 = vector.shape_cast %47 : vector<1x8x8xf32> to vector<8x8xf32>
    %49 = vector.broadcast %34 : vector<8x1xf32> to vector<8x8xf32>
    %50 = arith.mulf %49, %48 : vector<8x8xf32>
    %cst_28 = arith.constant dense<0.000000e+00> : vector<8x8xf32>
    %51 = tpu.matmul %37, %23, %cst_28 {dimension_numbers = #tpu.dot_dimension_numbers<[1], [0], [0], [1], [0, 0, 1, 1], [], []>} : vector<8x8xf32>, vector<8x8xf32>, vector<8x8xf32> -> vector<8x8xf32>
    %52 = arith.addf %50, %51 : vector<8x8xf32>
    %c0_29 = arith.constant 0 : index
    %c0_30 = arith.constant 0 : index
    %c0_31 = arith.constant 0 : index
    %53 = vector.load %arg15[%c0_29, %c0_30, %c0_31] : memref<4x8x8xf32, #tpu.memory_space<vmem>>, vector<1x8x8xf32>
    %54 = vector.shape_cast %53 : vector<1x8x8xf32> to vector<8x8xf32>
    %55 = vector.shape_cast %52 : vector<8x8xf32> to vector<1x8x8xf32>
    tpu.vector_store %arg15[%c0_29, %c0_30, %c0_31], %55 {strides = array<i32>} : memref<4x8x8xf32, #tpu.memory_space<vmem>>, vector<1x8x8xf32>,
    %c0_32 = arith.constant 0 : index
    %c0_33 = arith.constant 0 : index
    %c0_34 = arith.constant 0 : index
    %56 = vector.load %arg13[%c0_32, %c0_33, %c0_34] : memref<4x8x1xf32, #tpu.memory_space<vmem>>, vector<1x8x1xf32>
    %57 = vector.shape_cast %56 : vector<1x8x1xf32> to vector<8x1xf32>
    %58 = vector.shape_cast %32 : vector<8x1xf32> to vector<1x8x1xf32>
    tpu.vector_store %arg13[%c0_32, %c0_33, %c0_34], %58 {strides = array<i32>} : memref<4x8x1xf32, #tpu.memory_space<vmem>>, vector<1x8x1xf32>,
    %59 = vector.extract_strided_slice %9 {offsets = [0, 8], sizes = [8, 8], strides = [1, 1]} : vector<8x64xf32> to vector<8x8xf32>
    %60 = vector.extract_strided_slice %9 {offsets = [0, 40], sizes = [8, 8], strides = [1, 1]} : vector<8x64xf32> to vector<8x8xf32>
    %c1 = arith.constant 1 : index
    %c0_35 = arith.constant 0 : index
    %c0_36 = arith.constant 0 : index
    %61 = vector.load %arg12[%c1, %c0_35, %c0_36] : memref<4x8x8xf32, #tpu.memory_space<vmem>>, vector<1x8x8xf32>
    %62 = vector.shape_cast %61 : vector<1x8x8xf32> to vector<8x8xf32>
    %cst_37 = arith.constant dense<0.000000e+00> : vector<8x8xf32>
    %63 = tpu.matmul %62, %59, %cst_37 {dimension_numbers = #tpu.dot_dimension_numbers<[1], [1], [0], [0], [0, 0, 1, 0], [], []>} : vector<8x8xf32>, vector<8x8xf32>, vector<8x8xf32> -> vector<8x8xf32>
    %64 = arith.addf %63, %21 : vector<8x8xf32>
    %c1_38 = arith.constant 1 : index
    %c0_39 = arith.constant 0 : index
    %c0_40 = arith.constant 0 : index
    %65 = vector.load %arg13[%c1_38, %c0_39, %c0_40] : memref<4x8x1xf32, #tpu.memory_space<vmem>>, vector<1x8x1xf32>
    %66 = vector.shape_cast %65 : vector<1x8x1xf32> to vector<8x1xf32>
    %cst_41 = arith.constant dense<0xFF800000> : vector<8xf32>
    %67 = vector.multi_reduction <maximumf>, %64, %cst_41 [1] : vector<8x8xf32> to vector<8xf32>
    %68 = vector.shape_cast %67 : vector<8xf32> to vector<8x1xf32>
    %69 = arith.maximumf %66, %68 : vector<8x1xf32>
    %70 = arith.subf %66, %69 : vector<8x1xf32>
    %71 = math.exp %70 : vector<8x1xf32>
    %72 = vector.broadcast %69 : vector<8x1xf32> to vector<8x8xf32>
    %73 = arith.subf %64, %72 : vector<8x8xf32>
    %74 = math.exp %73 : vector<8x8xf32>
    %c1_42 = arith.constant 1 : index
    %c0_43 = arith.constant 0 : index
    %c0_44 = arith.constant 0 : index
    %75 = vector.load %arg14[%c1_42, %c0_43, %c0_44] : memref<4x8x1xf32, #tpu.memory_space<vmem>>, vector<1x8x1xf32>
    %76 = vector.shape_cast %75 : vector<1x8x1xf32> to vector<8x1xf32>
    %77 = arith.mulf %71, %76 : vector<8x1xf32>
    %cst_45 = arith.constant dense<0.000000e+00> : vector<8xf32>
    %78 = vector.multi_reduction <add>, %74, %cst_45 [1] : vector<8x8xf32> to vector<8xf32>
    %79 = vector.shape_cast %78 : vector<8xf32> to vector<8x1xf32>
    %80 = arith.addf %77, %79 : vector<8x1xf32>
    %c1_46 = arith.constant 1 : index
    %c0_47 = arith.constant 0 : index
    %c0_48 = arith.constant 0 : index
    %81 = vector.load %arg14[%c1_46, %c0_47, %c0_48] : memref<4x8x1xf32, #tpu.memory_space<vmem>>, vector<1x8x1xf32>
    %82 = vector.shape_cast %81 : vector<1x8x1xf32> to vector<8x1xf32>
    %83 = vector.shape_cast %80 : vector<8x1xf32> to vector<1x8x1xf32>
    tpu.vector_store %arg14[%c1_46, %c0_47, %c0_48], %83 {strides = array<i32>} : memref<4x8x1xf32, #tpu.memory_space<vmem>>, vector<1x8x1xf32>,
    %c1_49 = arith.constant 1 : index
    %c0_50 = arith.constant 0 : index
    %c0_51 = arith.constant 0 : index
    %84 = vector.load %arg15[%c1_49, %c0_50, %c0_51] : memref<4x8x8xf32, #tpu.memory_space<vmem>>, vector<1x8x8xf32>
    %85 = vector.shape_cast %84 : vector<1x8x8xf32> to vector<8x8xf32>
    %86 = vector.broadcast %71 : vector<8x1xf32> to vector<8x8xf32>
    %87 = arith.mulf %86, %85 : vector<8x8xf32>
    %cst_52 = arith.constant dense<0.000000e+00> : vector<8x8xf32>
    %88 = tpu.matmul %74, %60, %cst_52 {dimension_numbers = #tpu.dot_dimension_numbers<[1], [0], [0], [1], [0, 0, 1, 1], [], []>} : vector<8x8xf32>, vector<8x8xf32>, vector<8x8xf32> -> vector<8x8xf32>
    %89 = arith.addf %87, %88 : vector<8x8xf32>
    %c1_53 = arith.constant 1 : index
    %c0_54 = arith.constant 0 : index
    %c0_55 = arith.constant 0 : index
    %90 = vector.load %arg15[%c1_53, %c0_54, %c0_55] : memref<4x8x8xf32, #tpu.memory_space<vmem>>, vector<1x8x8xf32>
    %91 = vector.shape_cast %90 : vector<1x8x8xf32> to vector<8x8xf32>
    %92 = vector.shape_cast %89 : vector<8x8xf32> to vector<1x8x8xf32>
    tpu.vector_store %arg15[%c1_53, %c0_54, %c0_55], %92 {strides = array<i32>} : memref<4x8x8xf32, #tpu.memory_space<vmem>>, vector<1x8x8xf32>,
    %c1_56 = arith.constant 1 : index
    %c0_57 = arith.constant 0 : index
    %c0_58 = arith.constant 0 : index
    %93 = vector.load %arg13[%c1_56, %c0_57, %c0_58] : memref<4x8x1xf32, #tpu.memory_space<vmem>>, vector<1x8x1xf32>
    %94 = vector.shape_cast %93 : vector<1x8x1xf32> to vector<8x1xf32>
    %95 = vector.shape_cast %69 : vector<8x1xf32> to vector<1x8x1xf32>
    tpu.vector_store %arg13[%c1_56, %c0_57, %c0_58], %95 {strides = array<i32>} : memref<4x8x1xf32, #tpu.memory_space<vmem>>, vector<1x8x1xf32>,
    %96 = vector.extract_strided_slice %9 {offsets = [0, 16], sizes = [8, 8], strides = [1, 1]} : vector<8x64xf32> to vector<8x8xf32>
    %97 = vector.extract_strided_slice %9 {offsets = [0, 48], sizes = [8, 8], strides = [1, 1]} : vector<8x64xf32> to vector<8x8xf32>
    %c2 = arith.constant 2 : index
    %c0_59 = arith.constant 0 : index
    %c0_60 = arith.constant 0 : index
    %98 = vector.load %arg12[%c2, %c0_59, %c0_60] : memref<4x8x8xf32, #tpu.memory_space<vmem>>, vector<1x8x8xf32>
    %99 = vector.shape_cast %98 : vector<1x8x8xf32> to vector<8x8xf32>
    %cst_61 = arith.constant dense<0.000000e+00> : vector<8x8xf32>
    %100 = tpu.matmul %99, %96, %cst_61 {dimension_numbers = #tpu.dot_dimension_numbers<[1], [1], [0], [0], [0, 0, 1, 0], [], []>} : vector<8x8xf32>, vector<8x8xf32>, vector<8x8xf32> -> vector<8x8xf32>
    %101 = arith.addf %100, %21 : vector<8x8xf32>
    %c2_62 = arith.constant 2 : index
    %c0_63 = arith.constant 0 : index
    %c0_64 = arith.constant 0 : index
    %102 = vector.load %arg13[%c2_62, %c0_63, %c0_64] : memref<4x8x1xf32, #tpu.memory_space<vmem>>, vector<1x8x1xf32>
    %103 = vector.shape_cast %102 : vector<1x8x1xf32> to vector<8x1xf32>
    %cst_65 = arith.constant dense<0xFF800000> : vector<8xf32>
    %104 = vector.multi_reduction <maximumf>, %101, %cst_65 [1] : vector<8x8xf32> to vector<8xf32>
    %105 = vector.shape_cast %104 : vector<8xf32> to vector<8x1xf32>
    %106 = arith.maximumf %103, %105 : vector<8x1xf32>
    %107 = arith.subf %103, %106 : vector<8x1xf32>
    %108 = math.exp %107 : vector<8x1xf32>
    %109 = vector.broadcast %106 : vector<8x1xf32> to vector<8x8xf32>
    %110 = arith.subf %101, %109 : vector<8x8xf32>
    %111 = math.exp %110 : vector<8x8xf32>
    %c2_66 = arith.constant 2 : index
    %c0_67 = arith.constant 0 : index
    %c0_68 = arith.constant 0 : index
    %112 = vector.load %arg14[%c2_66, %c0_67, %c0_68] : memref<4x8x1xf32, #tpu.memory_space<vmem>>, vector<1x8x1xf32>
    %113 = vector.shape_cast %112 : vector<1x8x1xf32> to vector<8x1xf32>
    %114 = arith.mulf %108, %113 : vector<8x1xf32>
    %cst_69 = arith.constant dense<0.000000e+00> : vector<8xf32>
    %115 = vector.multi_reduction <add>, %111, %cst_69 [1] : vector<8x8xf32> to vector<8xf32>
    %116 = vector.shape_cast %115 : vector<8xf32> to vector<8x1xf32>
    %117 = arith.addf %114, %116 : vector<8x1xf32>
    %c2_70 = arith.constant 2 : index
    %c0_71 = arith.constant 0 : index
    %c0_72 = arith.constant 0 : index
    %118 = vector.load %arg14[%c2_70, %c0_71, %c0_72] : memref<4x8x1xf32, #tpu.memory_space<vmem>>, vector<1x8x1xf32>
    %119 = vector.shape_cast %118 : vector<1x8x1xf32> to vector<8x1xf32>
    %120 = vector.shape_cast %117 : vector<8x1xf32> to vector<1x8x1xf32>
    tpu.vector_store %arg14[%c2_70, %c0_71, %c0_72], %120 {strides = array<i32>} : memref<4x8x1xf32, #tpu.memory_space<vmem>>, vector<1x8x1xf32>,
    %c2_73 = arith.constant 2 : index
    %c0_74 = arith.constant 0 : index
    %c0_75 = arith.constant 0 : index
    %121 = vector.load %arg15[%c2_73, %c0_74, %c0_75] : memref<4x8x8xf32, #tpu.memory_space<vmem>>, vector<1x8x8xf32>
    %122 = vector.shape_cast %121 : vector<1x8x8xf32> to vector<8x8xf32>
    %123 = vector.broadcast %108 : vector<8x1xf32> to vector<8x8xf32>
    %124 = arith.mulf %123, %122 : vector<8x8xf32>
    %cst_76 = arith.constant dense<0.000000e+00> : vector<8x8xf32>
    %125 = tpu.matmul %111, %97, %cst_76 {dimension_numbers = #tpu.dot_dimension_numbers<[1], [0], [0], [1], [0, 0, 1, 1], [], []>} : vector<8x8xf32>, vector<8x8xf32>, vector<8x8xf32> -> vector<8x8xf32>
    %126 = arith.addf %124, %125 : vector<8x8xf32>
    %c2_77 = arith.constant 2 : index
    %c0_78 = arith.constant 0 : index
    %c0_79 = arith.constant 0 : index
    %127 = vector.load %arg15[%c2_77, %c0_78, %c0_79] : memref<4x8x8xf32, #tpu.memory_space<vmem>>, vector<1x8x8xf32>
    %128 = vector.shape_cast %127 : vector<1x8x8xf32> to vector<8x8xf32>
    %129 = vector.shape_cast %126 : vector<8x8xf32> to vector<1x8x8xf32>
    tpu.vector_store %arg15[%c2_77, %c0_78, %c0_79], %129 {strides = array<i32>} : memref<4x8x8xf32, #tpu.memory_space<vmem>>, vector<1x8x8xf32>,
    %c2_80 = arith.constant 2 : index
    %c0_81 = arith.constant 0 : index
    %c0_82 = arith.constant 0 : index
    %130 = vector.load %arg13[%c2_80, %c0_81, %c0_82] : memref<4x8x1xf32, #tpu.memory_space<vmem>>, vector<1x8x1xf32>
    %131 = vector.shape_cast %130 : vector<1x8x1xf32> to vector<8x1xf32>
    %132 = vector.shape_cast %106 : vector<8x1xf32> to vector<1x8x1xf32>
    tpu.vector_store %arg13[%c2_80, %c0_81, %c0_82], %132 {strides = array<i32>} : memref<4x8x1xf32, #tpu.memory_space<vmem>>, vector<1x8x1xf32>,
    %133 = vector.extract_strided_slice %9 {offsets = [0, 24], sizes = [8, 8], strides = [1, 1]} : vector<8x64xf32> to vector<8x8xf32>
    %134 = vector.extract_strided_slice %9 {offsets = [0, 56], sizes = [8, 8], strides = [1, 1]} : vector<8x64xf32> to vector<8x8xf32>
    %c3 = arith.constant 3 : index
    %c0_83 = arith.constant 0 : index
    %c0_84 = arith.constant 0 : index
    %135 = vector.load %arg12[%c3, %c0_83, %c0_84] : memref<4x8x8xf32, #tpu.memory_space<vmem>>, vector<1x8x8xf32>
    %136 = vector.shape_cast %135 : vector<1x8x8xf32> to vector<8x8xf32>
    %cst_85 = arith.constant dense<0.000000e+00> : vector<8x8xf32>
    %137 = tpu.matmul %136, %133, %cst_85 {dimension_numbers = #tpu.dot_dimension_numbers<[1], [1], [0], [0], [0, 0, 1, 0], [], []>} : vector<8x8xf32>, vector<8x8xf32>, vector<8x8xf32> -> vector<8x8xf32>
    %138 = arith.addf %137, %21 : vector<8x8xf32>
    %c3_86 = arith.constant 3 : index
    %c0_87 = arith.constant 0 : index
    %c0_88 = arith.constant 0 : index
    %139 = vector.load %arg13[%c3_86, %c0_87, %c0_88] : memref<4x8x1xf32, #tpu.memory_space<vmem>>, vector<1x8x1xf32>
    %140 = vector.shape_cast %139 : vector<1x8x1xf32> to vector<8x1xf32>
    %cst_89 = arith.constant dense<0xFF800000> : vector<8xf32>
    %141 = vector.multi_reduction <maximumf>, %138, %cst_89 [1] : vector<8x8xf32> to vector<8xf32>
    %142 = vector.shape_cast %141 : vector<8xf32> to vector<8x1xf32>
    %143 = arith.maximumf %140, %142 : vector<8x1xf32>
    %144 = arith.subf %140, %143 : vector<8x1xf32>
    %145 = math.exp %144 : vector<8x1xf32>
    %146 = vector.broadcast %143 : vector<8x1xf32> to vector<8x8xf32>
    %147 = arith.subf %138, %146 : vector<8x8xf32>
    %148 = math.exp %147 : vector<8x8xf32>
    %c3_90 = arith.constant 3 : index
    %c0_91 = arith.constant 0 : index
    %c0_92 = arith.constant 0 : index
    %149 = vector.load %arg14[%c3_90, %c0_91, %c0_92] : memref<4x8x1xf32, #tpu.memory_space<vmem>>, vector<1x8x1xf32>
    %150 = vector.shape_cast %149 : vector<1x8x1xf32> to vector<8x1xf32>
    %151 = arith.mulf %145, %150 : vector<8x1xf32>
    %cst_93 = arith.constant dense<0.000000e+00> : vector<8xf32>
    %152 = vector.multi_reduction <add>, %148, %cst_93 [1] : vector<8x8xf32> to vector<8xf32>
    %153 = vector.shape_cast %152 : vector<8xf32> to vector<8x1xf32>
    %154 = arith.addf %151, %153 : vector<8x1xf32>
    %c3_94 = arith.constant 3 : index
    %c0_95 = arith.constant 0 : index
    %c0_96 = arith.constant 0 : index
    %155 = vector.load %arg14[%c3_94, %c0_95, %c0_96] : memref<4x8x1xf32, #tpu.memory_space<vmem>>, vector<1x8x1xf32>
    %156 = vector.shape_cast %155 : vector<1x8x1xf32> to vector<8x1xf32>
    %157 = vector.shape_cast %154 : vector<8x1xf32> to vector<1x8x1xf32>
    tpu.vector_store %arg14[%c3_94, %c0_95, %c0_96], %157 {strides = array<i32>} : memref<4x8x1xf32, #tpu.memory_space<vmem>>, vector<1x8x1xf32>,
    %c3_97 = arith.constant 3 : index
    %c0_98 = arith.constant 0 : index
    %c0_99 = arith.constant 0 : index
    %158 = vector.load %arg15[%c3_97, %c0_98, %c0_99] : memref<4x8x8xf32, #tpu.memory_space<vmem>>, vector<1x8x8xf32>
    %159 = vector.shape_cast %158 : vector<1x8x8xf32> to vector<8x8xf32>
    %160 = vector.broadcast %145 : vector<8x1xf32> to vector<8x8xf32>
    %161 = arith.mulf %160, %159 : vector<8x8xf32>
    %cst_100 = arith.constant dense<0.000000e+00> : vector<8x8xf32>
    %162 = tpu.matmul %148, %134, %cst_100 {dimension_numbers = #tpu.dot_dimension_numbers<[1], [0], [0], [1], [0, 0, 1, 1], [], []>} : vector<8x8xf32>, vector<8x8xf32>, vector<8x8xf32> -> vector<8x8xf32>
    %163 = arith.addf %161, %162 : vector<8x8xf32>
    %c3_101 = arith.constant 3 : index
    %c0_102 = arith.constant 0 : index
    %c0_103 = arith.constant 0 : index
    %164 = vector.load %arg15[%c3_101, %c0_102, %c0_103] : memref<4x8x8xf32, #tpu.memory_space<vmem>>, vector<1x8x8xf32>
    %165 = vector.shape_cast %164 : vector<1x8x8xf32> to vector<8x8xf32>
    %166 = vector.shape_cast %163 : vector<8x8xf32> to vector<1x8x8xf32>
    tpu.vector_store %arg15[%c3_101, %c0_102, %c0_103], %166 {strides = array<i32>} : memref<4x8x8xf32, #tpu.memory_space<vmem>>, vector<1x8x8xf32>,
    %c3_104 = arith.constant 3 : index
    %c0_105 = arith.constant 0 : index
    %c0_106 = arith.constant 0 : index
    %167 = vector.load %arg13[%c3_104, %c0_105, %c0_106] : memref<4x8x1xf32, #tpu.memory_space<vmem>>, vector<1x8x1xf32>
    %168 = vector.shape_cast %167 : vector<1x8x1xf32> to vector<8x1xf32>
    %169 = vector.shape_cast %143 : vector<8x1xf32> to vector<1x8x1xf32>
    tpu.vector_store %arg13[%c3_104, %c0_105, %c0_106], %169 {strides = array<i32>} : memref<4x8x1xf32, #tpu.memory_space<vmem>>, vector<1x8x1xf32>,
    %c1_i32 = arith.constant 1 : i32
    %170 = arith.cmpi eq, %arg2, %c1_i32 : i32
    %171 = arith.extui %170 : i1 to i32
    %c0_i32_107 = arith.constant 0 : i32
    %172 = arith.cmpi ne, %171, %c0_i32_107 : i32
    scf.if %172 {
      %c0_108 = arith.constant 0 : index
      %c0_109 = arith.constant 0 : index
      %173 = vector.load %arg10[%c0_108, %c0_109] : memref<1x32xf32, #tpu.memory_space<vmem>>, vector<1x32xf32>
      %c0_110 = arith.constant 0 : index
      %c0_111 = arith.constant 0 : index
      %c0_112 = arith.constant 0 : index
      %174 = vector.load %arg15[%c0_110, %c0_111, %c0_112] : memref<4x8x8xf32, #tpu.memory_space<vmem>>, vector<1x8x8xf32>
      %175 = vector.shape_cast %174 : vector<1x8x8xf32> to vector<8x8xf32>
      %c0_113 = arith.constant 0 : index
      %c0_114 = arith.constant 0 : index
      %c0_115 = arith.constant 0 : index
      %176 = vector.load %arg14[%c0_113, %c0_114, %c0_115] : memref<4x8x1xf32, #tpu.memory_space<vmem>>, vector<1x8x1xf32>
      %177 = vector.shape_cast %176 : vector<1x8x1xf32> to vector<8x1xf32>
      %178 = tpu.reciprocal %177 {approx = true} : vector<8x1xf32> -> vector<8x1xf32>
      %179 = vector.broadcast %178 : vector<8x1xf32> to vector<8x8xf32>
      %180 = arith.mulf %175, %179 : vector<8x8xf32>
      %c0_116 = arith.constant 0 : index
      %c0_117 = arith.constant 0 : index
      %c0_118 = arith.constant 0 : index
      %181 = vector.load %arg9[%c0_116, %c0_117, %c0_118] : memref<4x8x32xf32, #tpu.memory_space<vmem>>, vector<1x8x32xf32>
      %182 = vector.shape_cast %181 : vector<1x8x32xf32> to vector<8x32xf32>
      %cst_119 = arith.constant dense<0.000000e+00> : vector<8x32xf32>
      %183 = tpu.matmul %180, %182, %cst_119 {dimension_numbers = #tpu.dot_dimension_numbers<[1], [0], [0], [1], [0, 0, 1, 1], [], []>} : vector<8x8xf32>, vector<8x32xf32>, vector<8x32xf32> -> vector<8x32xf32>
      %184 = vector.broadcast %173 : vector<1x32xf32> to vector<8x32xf32>
      %185 = arith.addf %184, %183 : vector<8x32xf32>
      %c1_120 = arith.constant 1 : index
      %c0_121 = arith.constant 0 : index
      %c0_122 = arith.constant 0 : index
      %186 = vector.load %arg15[%c1_120, %c0_121, %c0_122] : memref<4x8x8xf32, #tpu.memory_space<vmem>>, vector<1x8x8xf32>
      %187 = vector.shape_cast %186 : vector<1x8x8xf32> to vector<8x8xf32>
      %c1_123 = arith.constant 1 : index
      %c0_124 = arith.constant 0 : index
      %c0_125 = arith.constant 0 : index
      %188 = vector.load %arg14[%c1_123, %c0_124, %c0_125] : memref<4x8x1xf32, #tpu.memory_space<vmem>>, vector<1x8x1xf32>
      %189 = vector.shape_cast %188 : vector<1x8x1xf32> to vector<8x1xf32>
      %190 = tpu.reciprocal %189 {approx = true} : vector<8x1xf32> -> vector<8x1xf32>
      %191 = vector.broadcast %190 : vector<8x1xf32> to vector<8x8xf32>
      %192 = arith.mulf %187, %191 : vector<8x8xf32>
      %c1_126 = arith.constant 1 : index
      %c0_127 = arith.constant 0 : index
      %c0_128 = arith.constant 0 : index
      %193 = vector.load %arg9[%c1_126, %c0_127, %c0_128] : memref<4x8x32xf32, #tpu.memory_space<vmem>>, vector<1x8x32xf32>
      %194 = vector.shape_cast %193 : vector<1x8x32xf32> to vector<8x32xf32>
      %cst_129 = arith.constant dense<0.000000e+00> : vector<8x32xf32>
      %195 = tpu.matmul %192, %194, %cst_129 {dimension_numbers = #tpu.dot_dimension_numbers<[1], [0], [0], [1], [0, 0, 1, 1], [], []>} : vector<8x8xf32>, vector<8x32xf32>, vector<8x32xf32> -> vector<8x32xf32>
      %196 = arith.addf %185, %195 : vector<8x32xf32>
      %c2_130 = arith.constant 2 : index
      %c0_131 = arith.constant 0 : index
      %c0_132 = arith.constant 0 : index
      %197 = vector.load %arg15[%c2_130, %c0_131, %c0_132] : memref<4x8x8xf32, #tpu.memory_space<vmem>>, vector<1x8x8xf32>
      %198 = vector.shape_cast %197 : vector<1x8x8xf32> to vector<8x8xf32>
      %c2_133 = arith.constant 2 : index
      %c0_134 = arith.constant 0 : index
      %c0_135 = arith.constant 0 : index
      %199 = vector.load %arg14[%c2_133, %c0_134, %c0_135] : memref<4x8x1xf32, #tpu.memory_space<vmem>>, vector<1x8x1xf32>
      %200 = vector.shape_cast %199 : vector<1x8x1xf32> to vector<8x1xf32>
      %201 = tpu.reciprocal %200 {approx = true} : vector<8x1xf32> -> vector<8x1xf32>
      %202 = vector.broadcast %201 : vector<8x1xf32> to vector<8x8xf32>
      %203 = arith.mulf %198, %202 : vector<8x8xf32>
      %c2_136 = arith.constant 2 : index
      %c0_137 = arith.constant 0 : index
      %c0_138 = arith.constant 0 : index
      %204 = vector.load %arg9[%c2_136, %c0_137, %c0_138] : memref<4x8x32xf32, #tpu.memory_space<vmem>>, vector<1x8x32xf32>
      %205 = vector.shape_cast %204 : vector<1x8x32xf32> to vector<8x32xf32>
      %cst_139 = arith.constant dense<0.000000e+00> : vector<8x32xf32>
      %206 = tpu.matmul %203, %205, %cst_139 {dimension_numbers = #tpu.dot_dimension_numbers<[1], [0], [0], [1], [0, 0, 1, 1], [], []>} : vector<8x8xf32>, vector<8x32xf32>, vector<8x32xf32> -> vector<8x32xf32>
      %207 = arith.addf %196, %206 : vector<8x32xf32>
      %c3_140 = arith.constant 3 : index
      %c0_141 = arith.constant 0 : index
      %c0_142 = arith.constant 0 : index
      %208 = vector.load %arg15[%c3_140, %c0_141, %c0_142] : memref<4x8x8xf32, #tpu.memory_space<vmem>>, vector<1x8x8xf32>
      %209 = vector.shape_cast %208 : vector<1x8x8xf32> to vector<8x8xf32>
      %c3_143 = arith.constant 3 : index
      %c0_144 = arith.constant 0 : index
      %c0_145 = arith.constant 0 : index
      %210 = vector.load %arg14[%c3_143, %c0_144, %c0_145] : memref<4x8x1xf32, #tpu.memory_space<vmem>>, vector<1x8x1xf32>
      %211 = vector.shape_cast %210 : vector<1x8x1xf32> to vector<8x1xf32>
      %212 = tpu.reciprocal %211 {approx = true} : vector<8x1xf32> -> vector<8x1xf32>
      %213 = vector.broadcast %212 : vector<8x1xf32> to vector<8x8xf32>
      %214 = arith.mulf %209, %213 : vector<8x8xf32>
      %c3_146 = arith.constant 3 : index
      %c0_147 = arith.constant 0 : index
      %c0_148 = arith.constant 0 : index
      %215 = vector.load %arg9[%c3_146, %c0_147, %c0_148] : memref<4x8x32xf32, #tpu.memory_space<vmem>>, vector<1x8x32xf32>
      %216 = vector.shape_cast %215 : vector<1x8x32xf32> to vector<8x32xf32>
      %cst_149 = arith.constant dense<0.000000e+00> : vector<8x32xf32>
      %217 = tpu.matmul %214, %216, %cst_149 {dimension_numbers = #tpu.dot_dimension_numbers<[1], [0], [0], [1], [0, 0, 1, 1], [], []>} : vector<8x8xf32>, vector<8x32xf32>, vector<8x32xf32> -> vector<8x32xf32>
      %218 = arith.addf %207, %217 : vector<8x32xf32>
      %c0_150 = arith.constant 0 : index
      %c0_151 = arith.constant 0 : index
      %c0_152 = arith.constant 0 : index
      %219 = vector.load %arg11[%c0_150, %c0_151, %c0_152] : memref<1x8x32xf32, #tpu.memory_space<vmem>>, vector<1x8x32xf32>
      %220 = vector.shape_cast %219 : vector<1x8x32xf32> to vector<8x32xf32>
      %221 = vector.shape_cast %218 : vector<8x32xf32> to vector<1x8x32xf32>
      tpu.vector_store %arg11[%c0_150, %c0_151, %c0_152], %221 {strides = array<i32>} : memref<1x8x32xf32, #tpu.memory_space<vmem>>, vector<1x8x32xf32>,
    } else {
    }
    return
  }
  func.func @transform_0(%arg0: i32, %arg1: i32, %arg2: i32) -> (i32, i32, i32) {
    %c0_i32 = arith.constant 0 : i32
    %c0_i32_0 = arith.constant 0 : i32
    return %arg0, %arg1, %c0_i32 : i32, i32, i32
  }
  func.func @transform_1(%arg0: i32, %arg1: i32, %arg2: i32) -> (i32, i32, i32) {
    %c0_i32 = arith.constant 0 : i32
    %c0_i32_0 = arith.constant 0 : i32
    return %arg0, %arg2, %c0_i32 : i32, i32, i32
  }
  func.func @transform_2(%arg0: i32, %arg1: i32, %arg2: i32) -> (i32, i32) {
    %c0_i32 = arith.constant 0 : i32
    %c0_i32_0 = arith.constant 0 : i32
    %c0_i32_1 = arith.constant 0 : i32
    return %c0_i32, %c0_i32_0 : i32, i32
  }
  func.func @transform_3(%arg0: i32, %arg1: i32, %arg2: i32) -> (i32, i32) {
    %c0_i32 = arith.constant 0 : i32
    %c0_i32_0 = arith.constant 0 : i32
    %c0_i32_1 = arith.constant 0 : i32
    return %c0_i32, %c0_i32_0 : i32, i32
  }
  func.func @transform_4(%arg0: i32, %arg1: i32, %arg2: i32) -> (i32, i32) {
    %c0_i32 = arith.constant 0 : i32
    %c0_i32_0 = arith.constant 0 : i32
    %c0_i32_1 = arith.constant 0 : i32
    return %c0_i32, %c0_i32_0 : i32, i32
  }
  func.func @transform_5(%arg0: i32, %arg1: i32, %arg2: i32) -> (i32, i32) {
    %c0_i32 = arith.constant 0 : i32
    %c0_i32_0 = arith.constant 0 : i32
    %c0_i32_1 = arith.constant 0 : i32
    return %c0_i32, %c0_i32_0 : i32, i32
  }
  func.func @transform_6(%arg0: i32, %arg1: i32, %arg2: i32) -> (i32, i32, i32) {
    %c0_i32 = arith.constant 0 : i32
    %c0_i32_0 = arith.constant 0 : i32
    %c0_i32_1 = arith.constant 0 : i32
    %c0_i32_2 = arith.constant 0 : i32
    return %c0_i32, %c0_i32_0, %c0_i32_1 : i32, i32, i32
  }
  func.func @transform_7(%arg0: i32, %arg1: i32, %arg2: i32) -> (i32, i32) {
    %c0_i32 = arith.constant 0 : i32
    %c0_i32_0 = arith.constant 0 : i32
    %c0_i32_1 = arith.constant 0 : i32
    return %c0_i32, %c0_i32_0 : i32, i32
  }
  func.func @transform_8(%arg0: i32, %arg1: i32, %arg2: i32) -> (i32, i32, i32) {
    %c0_i32 = arith.constant 0 : i32
    %c0_i32_0 = arith.constant 0 : i32
    return %arg0, %arg1, %c0_i32 : i32, i32, i32
  }
}

</mosaic_0001>

<llo_original>
// kernel: tpu_custom_call.1
$region0: #{tpu_custom_call.1}
  #allocation0 [shape = 'u32[]', space=smem, size = 0x4, offset = 0x4, fixed_abs, tag = 'smem constant byte address 0x4 - core index']
  #allocation1 [shape = 'u32[144,128]{1,0:T(1,128)}', space=vmem, size = 0x12000, scoped, tag = 'internal scratch']
  #allocation2 [shape = 'f32[4,8,8]{2,1,0:T(8,128)}', space=vmem, size = 0x4000, scoped, tag = 'scratch operand']
  #allocation3 [shape = 'f32[4,8,1]{2,1,0:T(8,128)}', space=vmem, size = 0x4000, scoped, tag = 'scratch operand']
  #allocation4 [shape = 'f32[4,8,1]{2,1,0:T(8,128)}', space=vmem, size = 0x4000, scoped, tag = 'scratch operand']
  #allocation5 [shape = 'f32[4,8,8]{2,1,0:T(8,128)}', space=vmem, size = 0x4000, scoped, tag = 'scratch operand']
  %s0 = inlined_call_operand.hbm [shape: f32[2,16,32], index: 0, kind: input, shape index: {}]
  %s1 = inlined_call_operand.hbm [shape: f32[2,16,32], index: 1, kind: input, shape index: {}]
  %s2 = inlined_call_operand.hbm [shape: f32[32,32], index: 2, kind: input, shape index: {}]
  %s3 = inlined_call_operand.vmem [shape: f32[1,32], index: 3, kind: input, shape index: {}]
  %s4 = inlined_call_operand.hbm [shape: f32[32,64], index: 4, kind: input, shape index: {}]
  %s5 = inlined_call_operand.vmem [shape: f32[1,64], index: 5, kind: input, shape index: {}]
  %s6 = inlined_call_operand.hbm [shape: f32[4,8,32], index: 6, kind: input, shape index: {}]
  %s7 = inlined_call_operand.vmem [shape: f32[1,32], index: 7, kind: input, shape index: {}]
  %s8 = inlined_call_operand.hbm [shape: f32[2,16,32], index: 8, kind: output, shape index: {}]
  %s9 = sld [smem:[#allocation0]]
  $region93: #{tpu_custom_call.1} parent=0
    _
  %s11 = ssub.s32 1, %s9
  %s12 = scalar_select 0, %s11, %s9
  $region1: #{tpu_custom_call.1} parent=0
    #allocation6 [shape = 'u8[8192]{0}', space=vmem, size = 0x2000, scoped, tag = 'input window, operand 0']
    #allocation7 [shape = 's32[2]{0}', space=sflag, size = 0x8, scoped, tag = 'scoped memory for tpu_custom_call.1']
    #allocation8 [shape = 's32[2]{0}', space=sflag, size = 0x8, scoped, tag = 'scoped memory for tpu_custom_call.1']
    #allocation9 [shape = 'u8[8192]{0}', space=vmem, size = 0x2000, scoped, tag = 'input window, operand 1']
    #allocation10 [shape = 's32[2]{0}', space=sflag, size = 0x8, scoped, tag = 'scoped memory for tpu_custom_call.1']
    #allocation11 [shape = 'u8[16384]{0}', space=vmem, size = 0x4000, scoped, tag = 'input window, operand 2, single buffered']
    #allocation12 [shape = 'u8[16384]{0}', space=vmem, size = 0x4000, scoped, tag = 'input window, operand 4, single buffered']
    #allocation13 [shape = 's32[1]{0}', space=sflag, size = 0x4, scoped, tag = 'scoped memory for tpu_custom_call.1']
    #allocation14 [shape = 'u8[16384]{0}', space=vmem, size = 0x4000, scoped, tag = 'input window, operand 6, single buffered']
    #allocation15 [shape = 'u8[8192]{0}', space=vmem, size = 0x2000, scoped, tag = 'output window, operand 0']
    %13 = vsyncpa [#allocation7], 0
    %s14 = scalar_lea.sflag [#allocation7], 1
    %15 = vsyncpa %s14, 0
    %16 = vsyncpa [#allocation10], 0
    %s17 = scalar_lea.sflag [#allocation10], 1
    %18 = vsyncpa %s17, 0
    %19 = vsyncpa [#allocation13], 0
    %20 = vsyncpa [#allocation8], 0
    %s21 = scalar_lea.sflag [#allocation8], 1
    %22 = vsyncpa %s21, 0
    loop: start=0, step=1, limit=10
    $region2: #{tpu_custom_call.1} parent=1 // loop_pre_header
      _
    $region3: #{tpu_custom_call.1} parent=1 // loop_header
      %s24 = sphi 0, %s28
      %p25 = scmp.ge.s32.totalorder %s24, 10
      %s31 = sphi 0, %s50
      %s32 = sphi 0, %s46
      %s33 = sphi 0, %s42
      %s34 = sphi 0, %s31
      %s35 = sphi 0, %s32
      %s36 = sphi 0, %s33
      %s37 = sphi 0, %s34
      %s38 = sphi 0, %s35
      %s39 = sphi 0, %s36
      %s55 = sphi 0, %s57
      %s58 = sphi 0, %s55
      %s59 = sphi 0, %s58
      %s75 = sphi 0, %s59
      %s83 = sphi 0, %s85
      %s86 = sphi 0, %s83
      %s87 = sphi 0, %s86
      %s103 = sphi 0, %s87
      %s107 = sphi 0, %s107
      %s109 = sphi 0, %s107
      %s110 = sphi 0, %s109
      %s124 = sphi 0, %s110
      %s128 = sphi 0, %s128
      %s130 = sphi 0, %s128
      %s131 = sphi 0, %s130
      %s145 = sphi 0, %s131
      %s149 = sphi 0, %s149
      %s151 = sphi 0, %s149
      %s152 = sphi 0, %s151
      %s166 = sphi 0, %s152
      %s170 = sphi 0, %s170
      %s172 = sphi 0, %s170
      %s173 = sphi 0, %s172
      %s187 = sphi 0, %s173
      %s191 = sphi 0, %s191
      %s193 = sphi 0, %s191
      %s194 = sphi 0, %s193
      %s208 = sphi 0, %s194
      %s212 = sphi 0, %s212
      %s214 = sphi 0, %s212
      %s215 = sphi 0, %s214
      %s229 = sphi 0, %s215
      %s237 = sphi 0, %s239
      %s240 = sphi 0, %s237
      %s241 = sphi 0, %s240
      %s257 = sphi 0, %s241
    $region4: #{tpu_custom_call.1} parent=1 // loop_header_branch
      %27 = sbr.rel (%p25) target = $region8
    $region5: #{tpu_custom_call.1} parent=1 // loop_body
      %s29 = ssub.s32 %s24, 1
      %s30 = ssub.s32 %s24, 2
      %s40 = sadd.s32 1, %s33
      %p41 = scmp.ge.s32.totalorder %s40, 2
      %s42 = scalar_select %p41, 0, %s40
      %s43 = sadd.s32 1, %s32
      %s44 = scalar_select %p41, %s43, %s32
      %p45 = scmp.ge.s32.totalorder %s44, 2
      %s46 = scalar_select %p45, 0, %s44
      %s47 = sadd.s32 1, %s31
      %s48 = scalar_select %p45, %s47, %s31
      %p49 = scmp.ge.s32.totalorder %s48, 2
      %s50 = scalar_select %p49, 0, %s48
      %s51 = ssub.s32 %s31, %s50
      %s52 = ssub.s32 %s32, %s46
      %s53 = sor.u32 %s51, %s52
      %p54 = scmp.eq.s32.totalorder %s53, 0
      %s56 = sadd.s32 %s55, 1
      %s57 = scalar_select %p54, %s55, %s56
      %p60 = pneg %p54
      %p61 = scmp.eq.s32.totalorder %s24, 7
      %p62 = por %p60, %p61
      %p63 = scmp.ne.s32.totalorder %s55, %s58
      %p64 = scmp.eq.s32.totalorder %s24, 0
      %p65 = por %p63, %p64
      %p66 = scmp.ne.s32.totalorder %s55, %s58
      %p67 = scmp.eq.s32.totalorder %s29, 7
      %p68 = por %p66, %p67
      %p69 = scmp.ne.s32.totalorder %s58, %s59
      %p70 = scmp.eq.s32.totalorder %s29, 0
      %p71 = por %p69, %p70
      %p72 = scmp.ne.s32.totalorder %s58, %s59
      %p73 = scmp.eq.s32.totalorder %s30, 7
      %p74 = por %p72, %p73
      %p76 = scmp.ne.s32.totalorder %s59, %s75
      %p77 = scmp.eq.s32.totalorder %s30, 0
      %p78 = por %p76, %p77
      %s79 = ssub.s32 %s31, %s50
      %s80 = ssub.s32 %s33, %s42
      %s81 = sor.u32 %s79, %s80
      %p82 = scmp.eq.s32.totalorder %s81, 0
      %s84 = sadd.s32 %s83, 1
      %s85 = scalar_select %p82, %s83, %s84
      %p88 = pneg %p82
      %p89 = scmp.eq.s32.totalorder %s24, 7
      %p90 = por %p88, %p89
      %p91 = scmp.ne.s32.totalorder %s83, %s86
      %p92 = scmp.eq.s32.totalorder %s24, 0
      %p93 = por %p91, %p92
      %p94 = scmp.ne.s32.totalorder %s83, %s86
      %p95 = scmp.eq.s32.totalorder %s29, 7
      %p96 = por %p94, %p95
      %p97 = scmp.ne.s32.totalorder %s86, %s87
      %p98 = scmp.eq.s32.totalorder %s29, 0
      %p99 = por %p97, %p98
      %p100 = scmp.ne.s32.totalorder %s86, %s87
      %p101 = scmp.eq.s32.totalorder %s30, 7
      %p102 = por %p100, %p101
      %p104 = scmp.ne.s32.totalorder %s87, %s103
      %p105 = scmp.eq.s32.totalorder %s30, 0
      %p106 = por %p104, %p105
      %s108 = sadd.s32 %s107, 1
      %p111 = scmp.eq.s32.totalorder %s24, 7
      %p112 = scmp.ne.s32.totalorder %s107, %s109
      %p113 = scmp.eq.s32.totalorder %s24, 0
      %p114 = por %p112, %p113
      %p115 = scmp.ne.s32.totalorder %s107, %s109
      %p116 = scmp.eq.s32.totalorder %s29, 7
      %p117 = por %p115, %p116
      %p118 = scmp.ne.s32.totalorder %s109, %s110
      %p119 = scmp.eq.s32.totalorder %s29, 0
      %p120 = por %p118, %p119
      %p121 = scmp.ne.s32.totalorder %s109, %s110
      %p122 = scmp.eq.s32.totalorder %s30, 7
      %p123 = por %p121, %p122
      %p125 = scmp.ne.s32.totalorder %s110, %s124
      %p126 = scmp.eq.s32.totalorder %s30, 0
      %p127 = por %p125, %p126
      %s129 = sadd.s32 %s128, 1
      %p132 = scmp.eq.s32.totalorder %s24, 7
      %p133 = scmp.ne.s32.totalorder %s128, %s130
      %p134 = scmp.eq.s32.totalorder %s24, 0
      %p135 = por %p133, %p134
      %p136 = scmp.ne.s32.totalorder %s128, %s130
      %p137 = scmp.eq.s32.totalorder %s29, 7
      %p138 = por %p136, %p137
      %p139 = scmp.ne.s32.totalorder %s130, %s131
      %p140 = scmp.eq.s32.totalorder %s29, 0
      %p141 = por %p139, %p140
      %p142 = scmp.ne.s32.totalorder %s130, %s131
      %p143 = scmp.eq.s32.totalorder %s30, 7
      %p144 = por %p142, %p143
      %p146 = scmp.ne.s32.totalorder %s131, %s145
      %p147 = scmp.eq.s32.totalorder %s30, 0
      %p148 = por %p146, %p147
      %s150 = sadd.s32 %s149, 1
      %p153 = scmp.eq.s32.totalorder %s24, 7
      %p154 = scmp.ne.s32.totalorder %s149, %s151
      %p155 = scmp.eq.s32.totalorder %s24, 0
      %p156 = por %p154, %p155
      %p157 = scmp.ne.s32.totalorder %s149, %s151
      %p158 = scmp.eq.s32.totalorder %s29, 7
      %p159 = por %p157, %p158
      %p160 = scmp.ne.s32.totalorder %s151, %s152
      %p161 = scmp.eq.s32.totalorder %s29, 0
      %p162 = por %p160, %p161
      %p163 = scmp.ne.s32.totalorder %s151, %s152
      %p164 = scmp.eq.s32.totalorder %s30, 7
      %p165 = por %p163, %p164
      %p167 = scmp.ne.s32.totalorder %s152, %s166
      %p168 = scmp.eq.s32.totalorder %s30, 0
      %p169 = por %p167, %p168
      %s171 = sadd.s32 %s170, 1
      %p174 = scmp.eq.s32.totalorder %s24, 7
      %p175 = scmp.ne.s32.totalorder %s170, %s172
      %p176 = scmp.eq.s32.totalorder %s24, 0
      %p177 = por %p175, %p176
      %p178 = scmp.ne.s32.totalorder %s170, %s172
      %p179 = scmp.eq.s32.totalorder %s29, 7
      %p180 = por %p178, %p179
      %p181 = scmp.ne.s32.totalorder %s172, %s173
      %p182 = scmp.eq.s32.totalorder %s29, 0
      %p183 = por %p181, %p182
      %p184 = scmp.ne.s32.totalorder %s172, %s173
      %p185 = scmp.eq.s32.totalorder %s30, 7
      %p186 = por %p184, %p185
      %p188 = scmp.ne.s32.totalorder %s173, %s187
      %p189 = scmp.eq.s32.totalorder %s30, 0
      %p190 = por %p188, %p189
      %s192 = sadd.s32 %s191, 1
      %p195 = scmp.eq.s32.totalorder %s24, 7
      %p196 = scmp.ne.s32.totalorder %s191, %s193
      %p197 = scmp.eq.s32.totalorder %s24, 0
      %p198 = por %p196, %p197
      %p199 = scmp.ne.s32.totalorder %s191, %s193
      %p200 = scmp.eq.s32.totalorder %s29, 7
      %p201 = por %p199, %p200
      %p202 = scmp.ne.s32.totalorder %s193, %s194
      %p203 = scmp.eq.s32.totalorder %s29, 0
      %p204 = por %p202, %p203
      %p205 = scmp.ne.s32.totalorder %s193, %s194
      %p206 = scmp.eq.s32.totalorder %s30, 7
      %p207 = por %p205, %p206
      %p209 = scmp.ne.s32.totalorder %s194, %s208
      %p210 = scmp.eq.s32.totalorder %s30, 0
      %p211 = por %p209, %p210
      %s213 = sadd.s32 %s212, 1
      %p216 = scmp.eq.s32.totalorder %s24, 7
      %p217 = scmp.ne.s32.totalorder %s212, %s214
      %p218 = scmp.eq.s32.totalorder %s24, 0
      %p219 = por %p217, %p218
      %p220 = scmp.ne.s32.totalorder %s212, %s214
      %p221 = scmp.eq.s32.totalorder %s29, 7
      %p222 = por %p220, %p221
      %p223 = scmp.ne.s32.totalorder %s214, %s215
      %p224 = scmp.eq.s32.totalorder %s29, 0
      %p225 = por %p223, %p224
      %p226 = scmp.ne.s32.totalorder %s214, %s215
      %p227 = scmp.eq.s32.totalorder %s30, 7
      %p228 = por %p226, %p227
      %p230 = scmp.ne.s32.totalorder %s215, %s229
      %p231 = scmp.eq.s32.totalorder %s30, 0
      %p232 = por %p230, %p231
      %s233 = ssub.s32 %s31, %s50
      %s234 = ssub.s32 %s32, %s46
      %s235 = sor.u32 %s233, %s234
      %p236 = scmp.eq.s32.totalorder %s235, 0
      %s238 = sadd.s32 %s237, 1
      %s239 = scalar_select %p236, %s237, %s238
      %p242 = pneg %p236
      %p243 = scmp.eq.s32.totalorder %s24, 7
      %p244 = por %p242, %p243
      %p245 = scmp.ne.s32.totalorder %s237, %s240
      %p246 = scmp.eq.s32.totalorder %s24, 0
      %p247 = por %p245, %p246
      %p248 = scmp.ne.s32.totalorder %s237, %s240
      %p249 = scmp.eq.s32.totalorder %s29, 7
      %p250 = por %p248, %p249
      %p251 = scmp.ne.s32.totalorder %s240, %s241
      %p252 = scmp.eq.s32.totalorder %s29, 0
      %p253 = por %p251, %p252
      %p254 = scmp.ne.s32.totalorder %s240, %s241
      %p255 = scmp.eq.s32.totalorder %s30, 7
      %p256 = por %p254, %p255
      %p258 = scmp.ne.s32.totalorder %s241, %s257
      %p259 = scmp.eq.s32.totalorder %s30, 0
      %p260 = por %p258, %p259
      %p261 = scmp.le.s32.totalorder 1, %s24
      %p262 = scmp.lt.s32.totalorder %s24, 9
      %p263 = pnand %p261, %p262
      %p264 = pneg %p263
      // Predicated region
      $region9: #{tpu_custom_call.1} parent=5 // pred_check
        _
      $region10: #{tpu_custom_call.1} parent=5 // pred_check_branch
        %266 = sbr.rel (%p263) target = $region12
      $region11: #{tpu_custom_call.1} parent=5 // pred_region
        %s267 = ssub.s32 %s24, 1
        // Predicated region
        $region13: #{tpu_custom_call.1} parent=11 // pred_check
          %p268 = pneg %p120
        $region14: #{tpu_custom_call.1} parent=11 // pred_check_branch
          %270 = sbr.rel (%p268) target = $region16
        $region15: #{tpu_custom_call.1} parent=11 // pred_region
          %s272 = ssub.s32 512, 512
          %273 = vsyncadd [#allocation10], %s272
          %s274 = sshll.u32 [#allocation11], 4
          %s275 = int_to_ptr.vmem [resolvable:$true] %s274
          %280 = dma.hbm_to_vmem [thread:$0]  %s2, 512, %s275, [#allocation10], 128, 128, 8
        $region16: #{tpu_custom_call.1} parent=11 // pred_fallthru
          _
        // Predicated region
        $region17: #{tpu_custom_call.1} parent=11 // pred_check
          %p281 = pneg %p141
        $region18: #{tpu_custom_call.1} parent=11 // pred_check_branch
          %283 = sbr.rel (%p281) target = $region20
        $region19: #{tpu_custom_call.1} parent=11 // pred_region
          _
        $region20: #{tpu_custom_call.1} parent=11 // pred_fallthru
          _
        // Predicated region
        $region21: #{tpu_custom_call.1} parent=11 // pred_check
          %p284 = pneg %p162
        $region22: #{tpu_custom_call.1} parent=11 // pred_check_branch
          %286 = sbr.rel (%p284) target = $region24
        $region23: #{tpu_custom_call.1} parent=11 // pred_region
          %s288 = ssub.s32 512, 512
          %289 = vsyncadd [#allocation13], %s288
          %s290 = sshll.u32 [#allocation12], 4
          %s291 = int_to_ptr.vmem [resolvable:$true] %s290
          %296 = dma.hbm_to_vmem [thread:$0]  %s4, 512, %s291, [#allocation13], 128, 128, 8
        $region24: #{tpu_custom_call.1} parent=11 // pred_fallthru
          _
        // Predicated region
        $region25: #{tpu_custom_call.1} parent=11 // pred_check
          %p297 = pneg %p183
        $region26: #{tpu_custom_call.1} parent=11 // pred_check_branch
          %299 = sbr.rel (%p297) target = $region28
        $region27: #{tpu_custom_call.1} parent=11 // pred_region
          _
        $region28: #{tpu_custom_call.1} parent=11 // pred_fallthru
          _
        // Predicated region
        $region29: #{tpu_custom_call.1} parent=11 // pred_check
          %p300 = pneg %p204
        $region30: #{tpu_custom_call.1} parent=11 // pred_check_branch
          %302 = sbr.rel (%p300) target = $region32
        $region31: #{tpu_custom_call.1} parent=11 // pred_region
          %s304 = ssub.s32 512, 512
          %305 = vsyncadd [#allocation13], %s304
          %s306 = sshll.u32 [#allocation14], 4
          %s307 = int_to_ptr.vmem [resolvable:$true] %s306
          %312 = dma.hbm_to_vmem [thread:$0]  %s6, 512, %s307, [#allocation13], 128, 128, 8
        $region32: #{tpu_custom_call.1} parent=11 // pred_fallthru
          _
        // Predicated region
        $region33: #{tpu_custom_call.1} parent=11 // pred_check
          %p313 = pneg %p225
        $region34: #{tpu_custom_call.1} parent=11 // pred_check_branch
          %315 = sbr.rel (%p313) target = $region36
        $region35: #{tpu_custom_call.1} parent=11 // pred_region
          _
        $region36: #{tpu_custom_call.1} parent=11 // pred_fallthru
          _
      $region12: #{tpu_custom_call.1} parent=5 // pred_fallthru
        _
      %p316 = scmp.lt.s32.totalorder %s24, 8
      // Predicated region
      $region37: #{tpu_custom_call.1} parent=5 // pred_check
        %p317 = pneg %p316
      $region38: #{tpu_custom_call.1} parent=5 // pred_check_branch
        %319 = sbr.rel (%p317) target = $region40
      $region39: #{tpu_custom_call.1} parent=5 // pred_region
        // Predicated region
        $region41: #{tpu_custom_call.1} parent=39 // pred_check
          %p320 = pneg %p65
        $region42: #{tpu_custom_call.1} parent=39 // pred_check_branch
          %322 = sbr.rel (%p320) target = $region44
        $region43: #{tpu_custom_call.1} parent=39 // pred_region
          %s323 = sand.u32 %s55, 1
          %s324 = scalar_lea.sflag [#allocation7], %s323
          %s325 = sand.u32 %s55, 1
          %s326 = smul.addr %s325, 8
          %s327 = scalar_lea.vmem [#allocation6], %s326
          %s329 = ssub.s32 128, 128
          %330 = vsyncadd %s324, %s329
          %s331 = smul.addr %s31, 2
          %s332 = sadd.s32 %s32, %s331
          %s333 = smul.addr %s332, 128
          %s334 = scalar_lea.hbm %s0, %s333
          %s336 = sshll.u32 %s327, 4
          %s337 = int_to_ptr.vmem [resolvable:$true] %s336
          %339 = dma.hbm_to_vmem [thread:$0]  %s334, 128, %s337, %s324
        $region44: #{tpu_custom_call.1} parent=39 // pred_fallthru
          _
        // Predicated region
        $region45: #{tpu_custom_call.1} parent=39 // pred_check
          %p340 = pneg %p93
        $region46: #{tpu_custom_call.1} parent=39 // pred_check_branch
          %342 = sbr.rel (%p340) target = $region48
        $region47: #{tpu_custom_call.1} parent=39 // pred_region
          %s343 = sand.u32 %s24, 1
          %s344 = scalar_lea.sflag [#allocation10], %s343
          %s345 = sand.u32 %s83, 1
          %s346 = smul.addr %s345, 8
          %s347 = scalar_lea.vmem [#allocation9], %s346
          %s349 = ssub.s32 128, 128
          %350 = vsyncadd %s344, %s349
          %s351 = smul.addr %s31, 2
          %s352 = sadd.s32 %s33, %s351
          %s353 = smul.addr %s352, 128
          %s354 = scalar_lea.hbm %s1, %s353
          %s356 = sshll.u32 %s347, 4
          %s357 = int_to_ptr.vmem [resolvable:$true] %s356
          %359 = dma.hbm_to_vmem [thread:$0]  %s354, 128, %s357, %s344
        $region48: #{tpu_custom_call.1} parent=39 // pred_fallthru
          _
      $region40: #{tpu_custom_call.1} parent=5 // pred_fallthru
        _
      %p360 = scmp.le.s32.totalorder 1, %s24
      %p361 = scmp.lt.s32.totalorder %s24, 9
      %p362 = pnand %p360, %p361
      %p363 = pneg %p362
      // Predicated region
      $region49: #{tpu_custom_call.1} parent=5 // pred_check
        _
      $region50: #{tpu_custom_call.1} parent=5 // pred_check_branch
        %365 = sbr.rel (%p362) target = $region52
      $region51: #{tpu_custom_call.1} parent=5 // pred_region
        %s366 = ssub.s32 %s24, 1
        %s367 = sand.u32 %s58, 1
        %s368 = scalar_lea.sflag [#allocation7], %s367
        %s369 = sand.u32 %s58, 1
        %s370 = smul.addr %s369, 8
        %s371 = scalar_lea.vmem [#allocation6], %s370
        // Predicated region
        $region53: #{tpu_custom_call.1} parent=51 // pred_check
          %p372 = pneg %p71
        $region54: #{tpu_custom_call.1} parent=51 // pred_check_branch
          %374 = sbr.rel (%p372) target = $region56
        $region55: #{tpu_custom_call.1} parent=51 // pred_region
          %375 = dma.done %s368, 128
        $region56: #{tpu_custom_call.1} parent=51 // pred_fallthru
          _
        %s376 = sand.u32 %s29, 1
        %s377 = scalar_lea.sflag [#allocation10], %s376
        %s378 = sand.u32 %s86, 1
        %s379 = smul.addr %s378, 8
        %s380 = scalar_lea.vmem [#allocation9], %s379
        // Predicated region
        $region57: #{tpu_custom_call.1} parent=51 // pred_check
          %p381 = pneg %p99
        $region58: #{tpu_custom_call.1} parent=51 // pred_check_branch
          %383 = sbr.rel (%p381) target = $region60
        $region59: #{tpu_custom_call.1} parent=51 // pred_region
          %384 = dma.done %s377, 128
        $region60: #{tpu_custom_call.1} parent=51 // pred_fallthru
          _
        // Predicated region
        $region61: #{tpu_custom_call.1} parent=51 // pred_check
          %p385 = pneg %p120
        $region62: #{tpu_custom_call.1} parent=51 // pred_check_branch
          %387 = sbr.rel (%p385) target = $region64
        $region63: #{tpu_custom_call.1} parent=51 // pred_region
          %388 = dma.done [#allocation10], 512
        $region64: #{tpu_custom_call.1} parent=51 // pred_fallthru
          _
        // Predicated region
        $region65: #{tpu_custom_call.1} parent=51 // pred_check
          %p389 = pneg %p162
        $region66: #{tpu_custom_call.1} parent=51 // pred_check_branch
          %391 = sbr.rel (%p389) target = $region68
        $region67: #{tpu_custom_call.1} parent=51 // pred_region
          %392 = dma.done [#allocation13], 512
        $region68: #{tpu_custom_call.1} parent=51 // pred_fallthru
          _
        // Predicated region
        $region69: #{tpu_custom_call.1} parent=51 // pred_check
          %p393 = pneg %p204
        $region70: #{tpu_custom_call.1} parent=51 // pred_check_branch
          %395 = sbr.rel (%p393) target = $region72
        $region71: #{tpu_custom_call.1} parent=51 // pred_region
          %396 = dma.done [#allocation13], 512
        $region72: #{tpu_custom_call.1} parent=51 // pred_fallthru
          _
        %s397 = sand.u32 %s58, 1
        %s398 = scalar_lea.sflag [#allocation7], %s397
        %s399 = sand.u32 %s58, 1
        %s400 = smul.addr %s399, 8
        %s401 = scalar_lea.vmem [#allocation6], %s400
        %p402 = pneg %p71
        %p403 = pneg %p68
        %s404 = sand.u32 %s29, 1
        %s405 = scalar_lea.sflag [#allocation10], %s404
        %s406 = sand.u32 %s86, 1
        %s407 = smul.addr %s406, 8
        %s408 = scalar_lea.vmem [#allocation9], %s407
        %p409 = pneg %p99
        %p410 = pneg %p96
        %p411 = pneg %p120
        %p412 = pneg %p117
        %p413 = pneg %p141
        %p414 = pneg %p138
        %p415 = pneg %p162
        %p416 = pneg %p159
        %p417 = pneg %p183
        %p418 = pneg %p180
        %p419 = pneg %p204
        %p420 = pneg %p201
        %p421 = pneg %p225
        %p422 = pneg %p222
        %p423 = pneg %p253
        %p424 = pneg %p250
        %s425 = sand.u32 %s240, 1
        %s426 = scalar_lea.sflag [#allocation8], %s425
        %s427 = sand.u32 %s240, 1
        %s428 = smul.addr %s427, 8
        %s429 = scalar_lea.vmem [#allocation15], %s428
        %p430 = scmp.eq.s32.totalorder %s36, 0
        // Predicated region
        $region73: #{tpu_custom_call.1} parent=51 // pred_check
          %p431 = pneg %p430
        $region74: #{tpu_custom_call.1} parent=51 // pred_check_branch
          %433 = sbr.rel (%p431) target = $region76
        $region75: #{tpu_custom_call.1} parent=51 // pred_region
          %v434 = vld [vmem:[%s371] sm:$0xff]
          %v435 = vld [vmem:[#allocation11] sm:$0xff]
          %v436 = vld [vmem:[#allocation11 + $0x8] sm:$0xff]
          %v437 = vld [vmem:[#allocation11 + $0x10] sm:$0xff]
          %v438 = vld [vmem:[#allocation11 + $0x18] sm:$0xff]
          %v439 = vld [vmem:[%s3] sm:$0x1]
          %v441 = vlaneseq
          %v442 = vshrl.u32 %v441, 7
          %v443 = vsub.s32 0, %v442
          %v444 = vrot.slane %v439, %v443
          %vm446 = vcmask 261120
          %v448 = vsel %vm446, %v434, 0
          %450 = vmatprep.subr.mxu0 0.0
          %451 = vmatpush1.msra.mxu0 %v435
          %452 = vmatprep.subr.mxu0 0.0
          %453 = vmatpush1.msra.mxu0 %v436
          %454 = vmatprep.subr.mxu0 0.0
          %455 = vmatpush1.msra.mxu0 %v437
          %456 = vmatprep.subr.mxu0 0.0
          %457 = vmatpush1.msra.mxu0 %v438
          %458 = vmatprep.subr.mxu0 0.0
          %459 = vmatpush1.msra.mxu0 0.0
          %460 = vmatprep.subr.mxu0 0.0
          %461 = vmatpush1.msra.mxu0 0.0
          %462 = vmatprep.subr.mxu0 0.0
          %463 = vmatpush1.msra.mxu0 0.0
          %464 = vmatprep.subr.mxu0 0.0
          %465 = vmatpush1.msra.mxu0 0.0
          %466 = vmatprep.subr.mxu0 0.0
          %467 = vmatpush1.msra.mxu0 0.0
          %468 = vmatprep.subr.mxu0 0.0
          %469 = vmatpush1.msra.mxu0 0.0
          %470 = vmatprep.subr.mxu0 0.0
          %471 = vmatpush1.msra.mxu0 0.0
          %472 = vmatprep.subr.mxu0 0.0
          %473 = vmatpush1.msra.mxu0 0.0
          %474 = vmatprep.subr.mxu0 0.0
          %475 = vmatpush1.msra.mxu0 0.0
          %476 = vmatprep.subr.mxu0 0.0
          %477 = vmatpush1.msra.mxu0 0.0
          %478 = vmatprep.subr.mxu0 0.0
          %479 = vmatpush1.msra.mxu0 0.0
          %480 = vmatprep.subr.mxu0 0.0
          %481 = vmatpush1.msra.mxu0 0.0
          %482 = vmatprep.subr.mxu0 0.0
          %483 = vmatpush1.msra.mxu0 0.0
          %484 = vmatprep.subr.mxu0 0.0
          %485 = vmatpush1.msra.mxu0 0.0
          %486 = vmatprep.subr.mxu0 0.0
          %487 = vmatpush1.msra.mxu0 0.0
          %488 = vmatprep.subr.mxu0 0.0
          %489 = vmatpush1.msra.mxu0 0.0
          %490 = vmatprep.subr.mxu0 0.0
          %491 = vmatpush1.msra.mxu0 0.0
          %492 = vmatprep.subr.mxu0 0.0
          %493 = vmatpush1.msra.mxu0 0.0
          %494 = vmatprep.subr.mxu0 0.0
          %495 = vmatpush1.msra.mxu0 0.0
          %496 = vmatprep.subr.mxu0 0.0
          %497 = vmatpush1.msra.mxu0 0.0
          %498 = vmatprep.subr.mxu0 0.0
          %499 = vmatpush1.msra.mxu0 0.0
          %500 = vmatprep.subr.mxu0 0.0
          %501 = vmatpush1.msra.mxu0 0.0
          %502 = vmatprep.subr.mxu0 0.0
          %503 = vmatpush1.msra.mxu0 0.0
          %504 = vmatprep.subr.mxu0 0.0
          %505 = vmatpush1.msra.mxu0 0.0
          %506 = vmatprep.subr.mxu0 0.0
          %507 = vmatpush1.msra.mxu0 0.0
          %508 = vmatprep.subr.mxu0 0.0
          %509 = vmatpush1.msra.mxu0 0.0
          %510 = vmatprep.subr.mxu0 0.0
          %511 = vmatpush1.msra.mxu0 0.0
          %512 = vmatprep.subr.mxu0 0.0
          %513 = vmatpush1.msra.mxu0 0.0
          %514 = vmatprep.mubr.f32.mxu0 0.0
          %515 = vmatmul.mubr.f32.gmra.mrb[0].mxu0 %v448
          %v516 = vpop.f32.mrb[0].mxu0
          %v517 = vadd.f32 %v444, %v516
          %v518 = vpop.f32.mrb[0].mxu0
          %519 = vdwg.mxu0
          %vm520 = vcmask 64512
          %521 = vst.msk [vmem:[#allocation2] sm:$0xff] %vm520, %v517
          %523 = vrot.lane.b32.xlu0 %v517, 120
          %v524 = vpop.permute.xlu0 %523
          %s526 = scalar_lea.vmem [#allocation2], 8
          %527 = vst.msk [vmem:[%s526] sm:$0xff] %vm520, %v524
          %528 = vrot.lane.b32.xlu0 %v517, 112
          %v529 = vpop.permute.xlu0 %528
          %s531 = scalar_lea.vmem [#allocation2], 16
          %532 = vst.msk [vmem:[%s531] sm:$0xff] %vm520, %v529
          %533 = vrot.lane.b32.xlu0 %v517, 104
          %v534 = vpop.permute.xlu0 %533
          %s536 = scalar_lea.vmem [#allocation2], 24
          %537 = vst.msk [vmem:[%s536] sm:$0xff] %vm520, %v534
          %vm538 = vcmask 7168
          %539 = vst.msk [vmem:[#allocation3] sm:$0xff] %vm538, -inf
          %540 = vst.msk [vmem:[#allocation3 + $0x8] sm:$0xff] %vm538, -inf
          %541 = vst.msk [vmem:[#allocation3 + $0x10] sm:$0xff] %vm538, -inf
          %542 = vst.msk [vmem:[#allocation3 + $0x18] sm:$0xff] %vm538, -inf
          %543 = vst.msk [vmem:[#allocation4] sm:$0xff] %vm538, 0.0
          %544 = vst.msk [vmem:[#allocation4 + $0x8] sm:$0xff] %vm538, 0.0
          %545 = vst.msk [vmem:[#allocation4 + $0x10] sm:$0xff] %vm538, 0.0
          %546 = vst.msk [vmem:[#allocation4 + $0x18] sm:$0xff] %vm538, 0.0
          %547 = vst.msk [vmem:[#allocation5] sm:$0xff] %vm520, 0.0
          %548 = vst.msk [vmem:[#allocation5 + $0x8] sm:$0xff] %vm520, 0.0
          %549 = vst.msk [vmem:[#allocation5 + $0x10] sm:$0xff] %vm520, 0.0
          %550 = vst.msk [vmem:[#allocation5 + $0x18] sm:$0xff] %vm520, 0.0
        $region76: #{tpu_custom_call.1} parent=51 // pred_fallthru
          _
        %v551 = vld [vmem:[%s380] sm:$0xff]
        %v552 = vld [vmem:[#allocation12] sm:$0xff]
        %v553 = vld [vmem:[#allocation12 + $0x8] sm:$0xff]
        %v554 = vld [vmem:[#allocation12 + $0x10] sm:$0xff]
        %v555 = vld [vmem:[#allocation12 + $0x18] sm:$0xff]
        %v556 = vld [vmem:[%s5] sm:$0x1]
        %v558 = vlaneseq
        %v559 = vshrl.u32 %v558, 7
        %v560 = vsub.s32 0, %v559
        %v561 = vrot.slane %v556, %v560
        %vm563 = vcmask 261120
        %v565 = vsel %vm563, %v551, 0
        %567 = vmatprep.subr.mxu0 0.0
        %568 = vmatpush1.msra.mxu0 %v552
        %569 = vmatprep.subr.mxu0 0.0
        %570 = vmatpush1.msra.mxu0 %v553
        %571 = vmatprep.subr.mxu0 0.0
        %572 = vmatpush1.msra.mxu0 %v554
        %573 = vmatprep.subr.mxu0 0.0
        %574 = vmatpush1.msra.mxu0 %v555
        %575 = vmatprep.subr.mxu0 0.0
        %576 = vmatpush1.msra.mxu0 0.0
        %577 = vmatprep.subr.mxu0 0.0
        %578 = vmatpush1.msra.mxu0 0.0
        %579 = vmatprep.subr.mxu0 0.0
        %580 = vmatpush1.msra.mxu0 0.0
        %581 = vmatprep.subr.mxu0 0.0
        %582 = vmatpush1.msra.mxu0 0.0
        %583 = vmatprep.subr.mxu0 0.0
        %584 = vmatpush1.msra.mxu0 0.0
        %585 = vmatprep.subr.mxu0 0.0
        %586 = vmatpush1.msra.mxu0 0.0
        %587 = vmatprep.subr.mxu0 0.0
        %588 = vmatpush1.msra.mxu0 0.0
        %589 = vmatprep.subr.mxu0 0.0
        %590 = vmatpush1.msra.mxu0 0.0
        %591 = vmatprep.subr.mxu0 0.0
        %592 = vmatpush1.msra.mxu0 0.0
        %593 = vmatprep.subr.mxu0 0.0
        %594 = vmatpush1.msra.mxu0 0.0
        %595 = vmatprep.subr.mxu0 0.0
        %596 = vmatpush1.msra.mxu0 0.0
        %597 = vmatprep.subr.mxu0 0.0
        %598 = vmatpush1.msra.mxu0 0.0
        %599 = vmatprep.subr.mxu0 0.0
        %600 = vmatpush1.msra.mxu0 0.0
        %601 = vmatprep.subr.mxu0 0.0
        %602 = vmatpush1.msra.mxu0 0.0
        %603 = vmatprep.subr.mxu0 0.0
        %604 = vmatpush1.msra.mxu0 0.0
        %605 = vmatprep.subr.mxu0 0.0
        %606 = vmatpush1.msra.mxu0 0.0
        %607 = vmatprep.subr.mxu0 0.0
        %608 = vmatpush1.msra.mxu0 0.0
        %609 = vmatprep.subr.mxu0 0.0
        %610 = vmatpush1.msra.mxu0 0.0
        %611 = vmatprep.subr.mxu0 0.0
        %612 = vmatpush1.msra.mxu0 0.0
        %613 = vmatprep.subr.mxu0 0.0
        %614 = vmatpush1.msra.mxu0 0.0
        %615 = vmatprep.subr.mxu0 0.0
        %616 = vmatpush1.msra.mxu0 0.0
        %617 = vmatprep.subr.mxu0 0.0
        %618 = vmatpush1.msra.mxu0 0.0
        %619 = vmatprep.subr.mxu0 0.0
        %620 = vmatpush1.msra.mxu0 0.0
        %621 = vmatprep.subr.mxu0 0.0
        %622 = vmatpush1.msra.mxu0 0.0
        %623 = vmatprep.subr.mxu0 0.0
        %624 = vmatpush1.msra.mxu0 0.0
        %625 = vmatprep.subr.mxu0 0.0
        %626 = vmatpush1.msra.mxu0 0.0
        %627 = vmatprep.subr.mxu0 0.0
        %628 = vmatpush1.msra.mxu0 0.0
        %629 = vmatprep.subr.mxu0 0.0
        %630 = vmatpush1.msra.mxu0 0.0
        %631 = vmatprep.mubr.f32.mxu0 0.0
        %632 = vmatmul.mubr.f32.gmra.mrb[0].mxu0 %v565
        %v633 = vpop.f32.mrb[0].mxu0
        %v634 = vadd.f32 %v561, %v633
        %v635 = vpop.f32.mrb[0].mxu0
        %636 = vdwg.mxu0
        %s637 = smul.u32 %s35, 8
        %v638 = vlaneseq
        %v639 = vshrl.u32 %v638, 7
        %v640 = vstv %s637
        %v641 = vadd.s32 %v640, %v639
        %s642 = smul.u32 %s36, 8
        %v643 = vlaneseq
        %v644 = vand.u32 %v643, 127
        %v645 = vstv %s642
        %v646 = vadd.s32 %v645, %v644
        %vm647 = vcmp.ge.s32.totalorder %v641, %v646
        %v648 = vsel %vm647, 0.0, -1e+09
        %v649 = vld [vmem:[#allocation2] sm:$0xff]
        %vm650 = vcmask 64512
        %v652 = vsel %vm650, %v649, 0
        %v655 = vsel %vm650, %v634, 0
        %657 = vmatprep.subr.mxu0 0.0
        %658 = vmatpush1.xpose.msra.mxu0 %v655
        %659 = vmatprep.subr.mxu0 0.0
        %660 = vmatpush1.xpose.msra.mxu0 0.0
        %661 = vmatprep.subr.mxu0 0.0
        %662 = vmatpush1.xpose.msra.mxu0 0.0
        %663 = vmatprep.subr.mxu0 0.0
        %664 = vmatpush1.xpose.msra.mxu0 0.0
        %665 = vmatprep.subr.mxu0 0.0
        %666 = vmatpush1.xpose.msra.mxu0 0.0
        %667 = vmatprep.subr.mxu0 0.0
        %668 = vmatpush1.xpose.msra.mxu0 0.0
        %669 = vmatprep.subr.mxu0 0.0
        %670 = vmatpush1.xpose.msra.mxu0 0.0
        %671 = vmatprep.subr.mxu0 0.0
        %672 = vmatpush1.xpose.msra.mxu0 0.0
        %673 = vmatprep.subr.mxu0 0.0
        %674 = vmatpush1.xpose.msra.mxu0 0.0
        %675 = vmatprep.subr.mxu0 0.0
        %676 = vmatpush1.xpose.msra.mxu0 0.0
        %677 = vmatprep.subr.mxu0 0.0
        %678 = vmatpush1.xpose.msra.mxu0 0.0
        %679 = vmatprep.subr.mxu0 0.0
        %680 = vmatpush1.xpose.msra.mxu0 0.0
        %681 = vmatprep.subr.mxu0 0.0
        %682 = vmatpush1.xpose.msra.mxu0 0.0
        %683 = vmatprep.subr.mxu0 0.0
        %684 = vmatpush1.xpose.msra.mxu0 0.0
        %685 = vmatprep.subr.mxu0 0.0
        %686 = vmatpush1.xpose.msra.mxu0 0.0
        %687 = vmatprep.subr.mxu0 0.0
        %688 = vmatpush1.xpose.msra.mxu0 0.0
        %689 = vmatprep.subr.mxu0 0.0
        %690 = vmatpush1.xpose.msra.mxu0 0.0
        %691 = vmatprep.subr.mxu0 0.0
        %692 = vmatpush1.xpose.msra.mxu0 0.0
        %693 = vmatprep.subr.mxu0 0.0
        %694 = vmatpush1.xpose.msra.mxu0 0.0
        %695 = vmatprep.subr.mxu0 0.0
        %696 = vmatpush1.xpose.msra.mxu0 0.0
        %697 = vmatprep.subr.mxu0 0.0
        %698 = vmatpush1.xpose.msra.mxu0 0.0
        %699 = vmatprep.subr.mxu0 0.0
        %700 = vmatpush1.xpose.msra.mxu0 0.0
        %701 = vmatprep.subr.mxu0 0.0
        %702 = vmatpush1.xpose.msra.mxu0 0.0
        %703 = vmatprep.subr.mxu0 0.0
        %704 = vmatpush1.xpose.msra.mxu0 0.0
        %705 = vmatprep.subr.mxu0 0.0
        %706 = vmatpush1.xpose.msra.mxu0 0.0
        %707 = vmatprep.subr.mxu0 0.0
        %708 = vmatpush1.xpose.msra.mxu0 0.0
        %709 = vmatprep.subr.mxu0 0.0
        %710 = vmatpush1.xpose.msra.mxu0 0.0
        %711 = vmatprep.subr.mxu0 0.0
        %712 = vmatpush1.xpose.msra.mxu0 0.0
        %713 = vmatprep.subr.mxu0 0.0
        %714 = vmatpush1.xpose.msra.mxu0 0.0
        %715 = vmatprep.subr.mxu0 0.0
        %716 = vmatpush1.xpose.msra.mxu0 0.0
        %717 = vmatprep.subr.mxu0 0.0
        %718 = vmatpush1.xpose.msra.mxu0 0.0
        %719 = vmatprep.subr.mxu0 0.0
        %720 = vmatpush1.xpose.msra.mxu0 0.0
        %721 = vmatprep.mubr.f32.mxu0 0.0
        %722 = vmatmul.mubr.f32.gmra.mrb[0].mxu0 %v652
        %v723 = vpop.f32.mrb[0].mxu0
        %v724 = vadd.f32 %v648, %v723
        %v725 = vpop.f32.mrb[0].mxu0
        %726 = vdwg.mxu0
        %v727 = vld [vmem:[#allocation3] sm:$0xff]
        %v728 = vsel %vm650, %v724, -inf
        %729 = vmax.xlane.f32.xlu0 %v728
        %v730 = vpop.xlane.xlu0 %729
        %v731 = vmax.f32 %v727, %v730
        %v732 = vsub.f32 %v727, %v731
        %v733 = vmul.f32 %v732, 1.442695
        %v734 = vpow.pop %v733
        %736 = vset.pattern.permute.xlu0 0
        %737 = vperm.xlu0 %736, %v731
        %v738 = vpop.permute.xlu0 %737
        %v740 = vsub.f32 %v724, %v738
        %v741 = vmul.f32 %v740, 1.442695
        %v742 = vpow.pop %v741
        %v743 = vld [vmem:[#allocation4] sm:$0xff]
        %v744 = vmul.f32 %v734, %v743
        %v745 = vsel %vm650, %v742, 0.0
        %746 = vadd.xlane.f32.xlu0 %v745
        %v747 = vpop.xlane.xlu0 %746
        %v748 = vadd.f32 %v744, %v747
        %vm749 = vcmask 7168
        %750 = vst.msk [vmem:[#allocation4] sm:$0xff] %vm749, %v748
        %v751 = vld [vmem:[#allocation5] sm:$0xff]
        %753 = vset.pattern.permute.xlu0 0
        %754 = vperm.xlu0 %753, %v734
        %v755 = vpop.permute.xlu0 %754
        %v757 = vmul.f32 %v755, %v751
        %758 = vrot.lane.b32.xlu0 %v634, 96
        %v759 = vpop.permute.xlu0 %758
        %v762 = vsel %vm650, %v742, 0
        %764 = vmatprep.subr.mxu0 0.0
        %765 = vmatpush1.msra.mxu0 %v759
        %766 = vmatprep.subr.mxu0 0.0
        %767 = vmatpush1.msra.mxu0 0.0
        %768 = vmatprep.subr.mxu0 0.0
        %769 = vmatpush1.msra.mxu0 0.0
        %770 = vmatprep.subr.mxu0 0.0
        %771 = vmatpush1.msra.mxu0 0.0
        %772 = vmatprep.subr.mxu0 0.0
        %773 = vmatpush1.msra.mxu0 0.0
        %774 = vmatprep.subr.mxu0 0.0
        %775 = vmatpush1.msra.mxu0 0.0
        %776 = vmatprep.subr.mxu0 0.0
        %777 = vmatpush1.msra.mxu0 0.0
        %778 = vmatprep.subr.mxu0 0.0
        %779 = vmatpush1.msra.mxu0 0.0
        %780 = vmatprep.subr.mxu0 0.0
        %781 = vmatpush1.msra.mxu0 0.0
        %782 = vmatprep.subr.mxu0 0.0
        %783 = vmatpush1.msra.mxu0 0.0
        %784 = vmatprep.subr.mxu0 0.0
        %785 = vmatpush1.msra.mxu0 0.0
        %786 = vmatprep.subr.mxu0 0.0
        %787 = vmatpush1.msra.mxu0 0.0
        %788 = vmatprep.subr.mxu0 0.0
        %789 = vmatpush1.msra.mxu0 0.0
        %790 = vmatprep.subr.mxu0 0.0
        %791 = vmatpush1.msra.mxu0 0.0
        %792 = vmatprep.subr.mxu0 0.0
        %793 = vmatpush1.msra.mxu0 0.0
        %794 = vmatprep.subr.mxu0 0.0
        %795 = vmatpush1.msra.mxu0 0.0
        %796 = vmatprep.subr.mxu0 0.0
        %797 = vmatpush1.msra.mxu0 0.0
        %798 = vmatprep.subr.mxu0 0.0
        %799 = vmatpush1.msra.mxu0 0.0
        %800 = vmatprep.subr.mxu0 0.0
        %801 = vmatpush1.msra.mxu0 0.0
        %802 = vmatprep.subr.mxu0 0.0
        %803 = vmatpush1.msra.mxu0 0.0
        %804 = vmatprep.subr.mxu0 0.0
        %805 = vmatpush1.msra.mxu0 0.0
        %806 = vmatprep.subr.mxu0 0.0
        %807 = vmatpush1.msra.mxu0 0.0
        %808 = vmatprep.subr.mxu0 0.0
        %809 = vmatpush1.msra.mxu0 0.0
        %810 = vmatprep.subr.mxu0 0.0
        %811 = vmatpush1.msra.mxu0 0.0
        %812 = vmatprep.subr.mxu0 0.0
        %813 = vmatpush1.msra.mxu0 0.0
        %814 = vmatprep.subr.mxu0 0.0
        %815 = vmatpush1.msra.mxu0 0.0
        %816 = vmatprep.subr.mxu0 0.0
        %817 = vmatpush1.msra.mxu0 0.0
        %818 = vmatprep.subr.mxu0 0.0
        %819 = vmatpush1.msra.mxu0 0.0
        %820 = vmatprep.subr.mxu0 0.0
        %821 = vmatpush1.msra.mxu0 0.0
        %822 = vmatprep.subr.mxu0 0.0
        %823 = vmatpush1.msra.mxu0 0.0
        %824 = vmatprep.subr.mxu0 0.0
        %825 = vmatpush1.msra.mxu0 0.0
        %826 = vmatprep.subr.mxu0 0.0
        %827 = vmatpush1.msra.mxu0 0.0
        %828 = vmatprep.mubr.f32.mxu0 0.0
        %829 = vmatmul.mubr.f32.gmra.mrb[0].mxu0 %v762
        %v830 = vpop.f32.mrb[0].mxu0
        %v831 = vadd.f32 0.0, %v830
        %v832 = vpop.f32.mrb[0].mxu0
        %833 = vdwg.mxu0
        %v834 = vadd.f32 %v757, %v831
        %835 = vst.msk [vmem:[#allocation5] sm:$0xff] %vm650, %v834
        %836 = vst.msk [vmem:[#allocation3] sm:$0xff] %vm749, %v731
        %s837 = scalar_lea.vmem [#allocation2], 8
        %v838 = vld [vmem:[%s837] sm:$0xff]
        %839 = vrot.lane.b32.xlu0 %v634, 120
        %v840 = vpop.permute.xlu0 %839
        %v842 = vsel %vm650, %v838, 0
        %v844 = vsel %vm650, %v840, 0
        %846 = vmatprep.subr.mxu0 0.0
        %847 = vmatpush1.xpose.msra.mxu0 %v844
        %848 = vmatprep.subr.mxu0 0.0
        %849 = vmatpush1.xpose.msra.mxu0 0.0
        %850 = vmatprep.subr.mxu0 0.0
        %851 = vmatpush1.xpose.msra.mxu0 0.0
        %852 = vmatprep.subr.mxu0 0.0
        %853 = vmatpush1.xpose.msra.mxu0 0.0
        %854 = vmatprep.subr.mxu0 0.0
        %855 = vmatpush1.xpose.msra.mxu0 0.0
        %856 = vmatprep.subr.mxu0 0.0
        %857 = vmatpush1.xpose.msra.mxu0 0.0
        %858 = vmatprep.subr.mxu0 0.0
        %859 = vmatpush1.xpose.msra.mxu0 0.0
        %860 = vmatprep.subr.mxu0 0.0
        %861 = vmatpush1.xpose.msra.mxu0 0.0
        %862 = vmatprep.subr.mxu0 0.0
        %863 = vmatpush1.xpose.msra.mxu0 0.0
        %864 = vmatprep.subr.mxu0 0.0
        %865 = vmatpush1.xpose.msra.mxu0 0.0
        %866 = vmatprep.subr.mxu0 0.0
        %867 = vmatpush1.xpose.msra.mxu0 0.0
        %868 = vmatprep.subr.mxu0 0.0
        %869 = vmatpush1.xpose.msra.mxu0 0.0
        %870 = vmatprep.subr.mxu0 0.0
        %871 = vmatpush1.xpose.msra.mxu0 0.0
        %872 = vmatprep.subr.mxu0 0.0
        %873 = vmatpush1.xpose.msra.mxu0 0.0
        %874 = vmatprep.subr.mxu0 0.0
        %875 = vmatpush1.xpose.msra.mxu0 0.0
        %876 = vmatprep.subr.mxu0 0.0
        %877 = vmatpush1.xpose.msra.mxu0 0.0
        %878 = vmatprep.subr.mxu0 0.0
        %879 = vmatpush1.xpose.msra.mxu0 0.0
        %880 = vmatprep.subr.mxu0 0.0
        %881 = vmatpush1.xpose.msra.mxu0 0.0
        %882 = vmatprep.subr.mxu0 0.0
        %883 = vmatpush1.xpose.msra.mxu0 0.0
        %884 = vmatprep.subr.mxu0 0.0
        %885 = vmatpush1.xpose.msra.mxu0 0.0
        %886 = vmatprep.subr.mxu0 0.0
        %887 = vmatpush1.xpose.msra.mxu0 0.0
        %888 = vmatprep.subr.mxu0 0.0
        %889 = vmatpush1.xpose.msra.mxu0 0.0
        %890 = vmatprep.subr.mxu0 0.0
        %891 = vmatpush1.xpose.msra.mxu0 0.0
        %892 = vmatprep.subr.mxu0 0.0
        %893 = vmatpush1.xpose.msra.mxu0 0.0
        %894 = vmatprep.subr.mxu0 0.0
        %895 = vmatpush1.xpose.msra.mxu0 0.0
        %896 = vmatprep.subr.mxu0 0.0
        %897 = vmatpush1.xpose.msra.mxu0 0.0
        %898 = vmatprep.subr.mxu0 0.0
        %899 = vmatpush1.xpose.msra.mxu0 0.0
        %900 = vmatprep.subr.mxu0 0.0
        %901 = vmatpush1.xpose.msra.mxu0 0.0
        %902 = vmatprep.subr.mxu0 0.0
        %903 = vmatpush1.xpose.msra.mxu0 0.0
        %904 = vmatprep.subr.mxu0 0.0
        %905 = vmatpush1.xpose.msra.mxu0 0.0
        %906 = vmatprep.subr.mxu0 0.0
        %907 = vmatpush1.xpose.msra.mxu0 0.0
        %908 = vmatprep.subr.mxu0 0.0
        %909 = vmatpush1.xpose.msra.mxu0 0.0
        %910 = vmatprep.mubr.f32.mxu0 0.0
        %911 = vmatmul.mubr.f32.gmra.mrb[0].mxu0 %v842
        %v912 = vpop.f32.mrb[0].mxu0
        %v913 = vadd.f32 %v648, %v912
        %v914 = vpop.f32.mrb[0].mxu0
        %915 = vdwg.mxu0
        %s916 = scalar_lea.vmem [#allocation3], 8
        %v917 = vld [vmem:[%s916] sm:$0xff]
        %v918 = vsel %vm650, %v913, -inf
        %919 = vmax.xlane.f32.xlu0 %v918
        %v920 = vpop.xlane.xlu0 %919
        %v921 = vmax.f32 %v917, %v920
        %v922 = vsub.f32 %v917, %v921
        %v923 = vmul.f32 %v922, 1.442695
        %v924 = vpow.pop %v923
        %926 = vset.pattern.permute.xlu0 0
        %927 = vperm.xlu0 %926, %v921
        %v928 = vpop.permute.xlu0 %927
        %v930 = vsub.f32 %v913, %v928
        %v931 = vmul.f32 %v930, 1.442695
        %v932 = vpow.pop %v931
        %s933 = scalar_lea.vmem [#allocation4], 8
        %v934 = vld [vmem:[%s933] sm:$0xff]
        %v935 = vmul.f32 %v924, %v934
        %v936 = vsel %vm650, %v932, 0.0
        %937 = vadd.xlane.f32.xlu0 %v936
        %v938 = vpop.xlane.xlu0 %937
        %v939 = vadd.f32 %v935, %v938
        %940 = vst.msk [vmem:[%s933] sm:$0xff] %vm749, %v939
        %s941 = scalar_lea.vmem [#allocation5], 8
        %v942 = vld [vmem:[%s941] sm:$0xff]
        %944 = vset.pattern.permute.xlu0 0
        %945 = vperm.xlu0 %944, %v924
        %v946 = vpop.permute.xlu0 %945
        %v948 = vmul.f32 %v946, %v942
        %949 = vrot.lane.b32.xlu0 %v634, 88
        %v950 = vpop.permute.xlu0 %949
        %v953 = vsel %vm650, %v932, 0
        %955 = vmatprep.subr.mxu0 0.0
        %956 = vmatpush1.msra.mxu0 %v950
        %957 = vmatprep.subr.mxu0 0.0
        %958 = vmatpush1.msra.mxu0 0.0
        %959 = vmatprep.subr.mxu0 0.0
        %960 = vmatpush1.msra.mxu0 0.0
        %961 = vmatprep.subr.mxu0 0.0
        %962 = vmatpush1.msra.mxu0 0.0
        %963 = vmatprep.subr.mxu0 0.0
        %964 = vmatpush1.msra.mxu0 0.0
        %965 = vmatprep.subr.mxu0 0.0
        %966 = vmatpush1.msra.mxu0 0.0
        %967 = vmatprep.subr.mxu0 0.0
        %968 = vmatpush1.msra.mxu0 0.0
        %969 = vmatprep.subr.mxu0 0.0
        %970 = vmatpush1.msra.mxu0 0.0
        %971 = vmatprep.subr.mxu0 0.0
        %972 = vmatpush1.msra.mxu0 0.0
        %973 = vmatprep.subr.mxu0 0.0
        %974 = vmatpush1.msra.mxu0 0.0
        %975 = vmatprep.subr.mxu0 0.0
        %976 = vmatpush1.msra.mxu0 0.0
        %977 = vmatprep.subr.mxu0 0.0
        %978 = vmatpush1.msra.mxu0 0.0
        %979 = vmatprep.subr.mxu0 0.0
        %980 = vmatpush1.msra.mxu0 0.0
        %981 = vmatprep.subr.mxu0 0.0
        %982 = vmatpush1.msra.mxu0 0.0
        %983 = vmatprep.subr.mxu0 0.0
        %984 = vmatpush1.msra.mxu0 0.0
        %985 = vmatprep.subr.mxu0 0.0
        %986 = vmatpush1.msra.mxu0 0.0
        %987 = vmatprep.subr.mxu0 0.0
        %988 = vmatpush1.msra.mxu0 0.0
        %989 = vmatprep.subr.mxu0 0.0
        %990 = vmatpush1.msra.mxu0 0.0
        %991 = vmatprep.subr.mxu0 0.0
        %992 = vmatpush1.msra.mxu0 0.0
        %993 = vmatprep.subr.mxu0 0.0
        %994 = vmatpush1.msra.mxu0 0.0
        %995 = vmatprep.subr.mxu0 0.0
        %996 = vmatpush1.msra.mxu0 0.0
        %997 = vmatprep.subr.mxu0 0.0
        %998 = vmatpush1.msra.mxu0 0.0
        %999 = vmatprep.subr.mxu0 0.0
        %1000 = vmatpush1.msra.mxu0 0.0
        %1001 = vmatprep.subr.mxu0 0.0
        %1002 = vmatpush1.msra.mxu0 0.0
        %1003 = vmatprep.subr.mxu0 0.0
        %1004 = vmatpush1.msra.mxu0 0.0
        %1005 = vmatprep.subr.mxu0 0.0
        %1006 = vmatpush1.msra.mxu0 0.0
        %1007 = vmatprep.subr.mxu0 0.0
        %1008 = vmatpush1.msra.mxu0 0.0
        %1009 = vmatprep.subr.mxu0 0.0
        %1010 = vmatpush1.msra.mxu0 0.0
        %1011 = vmatprep.subr.mxu0 0.0
        %1012 = vmatpush1.msra.mxu0 0.0
        %1013 = vmatprep.subr.mxu0 0.0
        %1014 = vmatpush1.msra.mxu0 0.0
        %1015 = vmatprep.subr.mxu0 0.0
        %1016 = vmatpush1.msra.mxu0 0.0
        %1017 = vmatprep.subr.mxu0 0.0
        %1018 = vmatpush1.msra.mxu0 0.0
        %1019 = vmatprep.mubr.f32.mxu0 0.0
        %1020 = vmatmul.mubr.f32.gmra.mrb[0].mxu0 %v953
        %v1021 = vpop.f32.mrb[0].mxu0
        %v1022 = vadd.f32 0.0, %v1021
        %v1023 = vpop.f32.mrb[0].mxu0
        %1024 = vdwg.mxu0
        %v1025 = vadd.f32 %v948, %v1022
        %1026 = vst.msk [vmem:[%s941] sm:$0xff] %vm650, %v1025
        %1027 = vst.msk [vmem:[%s916] sm:$0xff] %vm749, %v921
        %s1028 = scalar_lea.vmem [#allocation2], 16
        %v1029 = vld [vmem:[%s1028] sm:$0xff]
        %1030 = vrot.lane.b32.xlu0 %v634, 112
        %v1031 = vpop.permute.xlu0 %1030
        %v1033 = vsel %vm650, %v1029, 0
        %v1035 = vsel %vm650, %v1031, 0
        %1037 = vmatprep.subr.mxu0 0.0
        %1038 = vmatpush1.xpose.msra.mxu0 %v1035
        %1039 = vmatprep.subr.mxu0 0.0
        %1040 = vmatpush1.xpose.msra.mxu0 0.0
        %1041 = vmatprep.subr.mxu0 0.0
        %1042 = vmatpush1.xpose.msra.mxu0 0.0
        %1043 = vmatprep.subr.mxu0 0.0
        %1044 = vmatpush1.xpose.msra.mxu0 0.0
        %1045 = vmatprep.subr.mxu0 0.0
        %1046 = vmatpush1.xpose.msra.mxu0 0.0
        %1047 = vmatprep.subr.mxu0 0.0
        %1048 = vmatpush1.xpose.msra.mxu0 0.0
        %1049 = vmatprep.subr.mxu0 0.0
        %1050 = vmatpush1.xpose.msra.mxu0 0.0
        %1051 = vmatprep.subr.mxu0 0.0
        %1052 = vmatpush1.xpose.msra.mxu0 0.0
        %1053 = vmatprep.subr.mxu0 0.0
        %1054 = vmatpush1.xpose.msra.mxu0 0.0
        %1055 = vmatprep.subr.mxu0 0.0
        %1056 = vmatpush1.xpose.msra.mxu0 0.0
        %1057 = vmatprep.subr.mxu0 0.0
        %1058 = vmatpush1.xpose.msra.mxu0 0.0
        %1059 = vmatprep.subr.mxu0 0.0
        %1060 = vmatpush1.xpose.msra.mxu0 0.0
        %1061 = vmatprep.subr.mxu0 0.0
        %1062 = vmatpush1.xpose.msra.mxu0 0.0
        %1063 = vmatprep.subr.mxu0 0.0
        %1064 = vmatpush1.xpose.msra.mxu0 0.0
        %1065 = vmatprep.subr.mxu0 0.0
        %1066 = vmatpush1.xpose.msra.mxu0 0.0
        %1067 = vmatprep.subr.mxu0 0.0
        %1068 = vmatpush1.xpose.msra.mxu0 0.0
        %1069 = vmatprep.subr.mxu0 0.0
        %1070 = vmatpush1.xpose.msra.mxu0 0.0
        %1071 = vmatprep.subr.mxu0 0.0
        %1072 = vmatpush1.xpose.msra.mxu0 0.0
        %1073 = vmatprep.subr.mxu0 0.0
        %1074 = vmatpush1.xpose.msra.mxu0 0.0
        %1075 = vmatprep.subr.mxu0 0.0
        %1076 = vmatpush1.xpose.msra.mxu0 0.0
        %1077 = vmatprep.subr.mxu0 0.0
        %1078 = vmatpush1.xpose.msra.mxu0 0.0
        %1079 = vmatprep.subr.mxu0 0.0
        %1080 = vmatpush1.xpose.msra.mxu0 0.0
        %1081 = vmatprep.subr.mxu0 0.0
        %1082 = vmatpush1.xpose.msra.mxu0 0.0
        %1083 = vmatprep.subr.mxu0 0.0
        %1084 = vmatpush1.xpose.msra.mxu0 0.0
        %1085 = vmatprep.subr.mxu0 0.0
        %1086 = vmatpush1.xpose.msra.mxu0 0.0
        %1087 = vmatprep.subr.mxu0 0.0
        %1088 = vmatpush1.xpose.msra.mxu0 0.0
        %1089 = vmatprep.subr.mxu0 0.0
        %1090 = vmatpush1.xpose.msra.mxu0 0.0
        %1091 = vmatprep.subr.mxu0 0.0
        %1092 = vmatpush1.xpose.msra.mxu0 0.0
        %1093 = vmatprep.subr.mxu0 0.0
        %1094 = vmatpush1.xpose.msra.mxu0 0.0
        %1095 = vmatprep.subr.mxu0 0.0
        %1096 = vmatpush1.xpose.msra.mxu0 0.0
        %1097 = vmatprep.subr.mxu0 0.0
        %1098 = vmatpush1.xpose.msra.mxu0 0.0
        %1099 = vmatprep.subr.mxu0 0.0
        %1100 = vmatpush1.xpose.msra.mxu0 0.0
        %1101 = vmatprep.mubr.f32.mxu0 0.0
        %1102 = vmatmul.mubr.f32.gmra.mrb[0].mxu0 %v1033
        %v1103 = vpop.f32.mrb[0].mxu0
        %v1104 = vadd.f32 %v648, %v1103
        %v1105 = vpop.f32.mrb[0].mxu0
        %1106 = vdwg.mxu0
        %s1107 = scalar_lea.vmem [#allocation3], 16
        %v1108 = vld [vmem:[%s1107] sm:$0xff]
        %v1109 = vsel %vm650, %v1104, -inf
        %1110 = vmax.xlane.f32.xlu0 %v1109
        %v1111 = vpop.xlane.xlu0 %1110
        %v1112 = vmax.f32 %v1108, %v1111
        %v1113 = vsub.f32 %v1108, %v1112
        %v1114 = vmul.f32 %v1113, 1.442695
        %v1115 = vpow.pop %v1114
        %1117 = vset.pattern.permute.xlu0 0
        %1118 = vperm.xlu0 %1117, %v1112
        %v1119 = vpop.permute.xlu0 %1118
        %v1121 = vsub.f32 %v1104, %v1119
        %v1122 = vmul.f32 %v1121, 1.442695
        %v1123 = vpow.pop %v1122
        %s1124 = scalar_lea.vmem [#allocation4], 16
        %v1125 = vld [vmem:[%s1124] sm:$0xff]
        %v1126 = vmul.f32 %v1115, %v1125
        %v1127 = vsel %vm650, %v1123, 0.0
        %1128 = vadd.xlane.f32.xlu0 %v1127
        %v1129 = vpop.xlane.xlu0 %1128
        %v1130 = vadd.f32 %v1126, %v1129
        %1131 = vst.msk [vmem:[%s1124] sm:$0xff] %vm749, %v1130
        %s1132 = scalar_lea.vmem [#allocation5], 16
        %v1133 = vld [vmem:[%s1132] sm:$0xff]
        %1135 = vset.pattern.permute.xlu0 0
        %1136 = vperm.xlu0 %1135, %v1115
        %v1137 = vpop.permute.xlu0 %1136
        %v1139 = vmul.f32 %v1137, %v1133
        %1140 = vrot.lane.b32.xlu0 %v634, 80
        %v1141 = vpop.permute.xlu0 %1140
        %v1144 = vsel %vm650, %v1123, 0
        %1146 = vmatprep.subr.mxu0 0.0
        %1147 = vmatpush1.msra.mxu0 %v1141
        %1148 = vmatprep.subr.mxu0 0.0
        %1149 = vmatpush1.msra.mxu0 0.0
        %1150 = vmatprep.subr.mxu0 0.0
        %1151 = vmatpush1.msra.mxu0 0.0
        %1152 = vmatprep.subr.mxu0 0.0
        %1153 = vmatpush1.msra.mxu0 0.0
        %1154 = vmatprep.subr.mxu0 0.0
        %1155 = vmatpush1.msra.mxu0 0.0
        %1156 = vmatprep.subr.mxu0 0.0
        %1157 = vmatpush1.msra.mxu0 0.0
        %1158 = vmatprep.subr.mxu0 0.0
        %1159 = vmatpush1.msra.mxu0 0.0
        %1160 = vmatprep.subr.mxu0 0.0
        %1161 = vmatpush1.msra.mxu0 0.0
        %1162 = vmatprep.subr.mxu0 0.0
        %1163 = vmatpush1.msra.mxu0 0.0
        %1164 = vmatprep.subr.mxu0 0.0
        %1165 = vmatpush1.msra.mxu0 0.0
        %1166 = vmatprep.subr.mxu0 0.0
        %1167 = vmatpush1.msra.mxu0 0.0
        %1168 = vmatprep.subr.mxu0 0.0
        %1169 = vmatpush1.msra.mxu0 0.0
        %1170 = vmatprep.subr.mxu0 0.0
        %1171 = vmatpush1.msra.mxu0 0.0
        %1172 = vmatprep.subr.mxu0 0.0
        %1173 = vmatpush1.msra.mxu0 0.0
        %1174 = vmatprep.subr.mxu0 0.0
        %1175 = vmatpush1.msra.mxu0 0.0
        %1176 = vmatprep.subr.mxu0 0.0
        %1177 = vmatpush1.msra.mxu0 0.0
        %1178 = vmatprep.subr.mxu0 0.0
        %1179 = vmatpush1.msra.mxu0 0.0
        %1180 = vmatprep.subr.mxu0 0.0
        %1181 = vmatpush1.msra.mxu0 0.0
        %1182 = vmatprep.subr.mxu0 0.0
        %1183 = vmatpush1.msra.mxu0 0.0
        %1184 = vmatprep.subr.mxu0 0.0
        %1185 = vmatpush1.msra.mxu0 0.0
        %1186 = vmatprep.subr.mxu0 0.0
        %1187 = vmatpush1.msra.mxu0 0.0
        %1188 = vmatprep.subr.mxu0 0.0
        %1189 = vmatpush1.msra.mxu0 0.0
        %1190 = vmatprep.subr.mxu0 0.0
        %1191 = vmatpush1.msra.mxu0 0.0
        %1192 = vmatprep.subr.mxu0 0.0
        %1193 = vmatpush1.msra.mxu0 0.0
        %1194 = vmatprep.subr.mxu0 0.0
        %1195 = vmatpush1.msra.mxu0 0.0
        %1196 = vmatprep.subr.mxu0 0.0
        %1197 = vmatpush1.msra.mxu0 0.0
        %1198 = vmatprep.subr.mxu0 0.0
        %1199 = vmatpush1.msra.mxu0 0.0
        %1200 = vmatprep.subr.mxu0 0.0
        %1201 = vmatpush1.msra.mxu0 0.0
        %1202 = vmatprep.subr.mxu0 0.0
        %1203 = vmatpush1.msra.mxu0 0.0
        %1204 = vmatprep.subr.mxu0 0.0
        %1205 = vmatpush1.msra.mxu0 0.0
        %1206 = vmatprep.subr.mxu0 0.0
        %1207 = vmatpush1.msra.mxu0 0.0
        %1208 = vmatprep.subr.mxu0 0.0
        %1209 = vmatpush1.msra.mxu0 0.0
        %1210 = vmatprep.mubr.f32.mxu0 0.0
        %1211 = vmatmul.mubr.f32.gmra.mrb[0].mxu0 %v1144
        %v1212 = vpop.f32.mrb[0].mxu0
        %v1213 = vadd.f32 0.0, %v1212
        %v1214 = vpop.f32.mrb[0].mxu0
        %1215 = vdwg.mxu0
        %v1216 = vadd.f32 %v1139, %v1213
        %1217 = vst.msk [vmem:[%s1132] sm:$0xff] %vm650, %v1216
        %1218 = vst.msk [vmem:[%s1107] sm:$0xff] %vm749, %v1112
        %s1219 = scalar_lea.vmem [#allocation2], 24
        %v1220 = vld [vmem:[%s1219] sm:$0xff]
        %1221 = vrot.lane.b32.xlu0 %v634, 104
        %v1222 = vpop.permute.xlu0 %1221
        %v1224 = vsel %vm650, %v1220, 0
        %v1226 = vsel %vm650, %v1222, 0
        %1228 = vmatprep.subr.mxu0 0.0
        %1229 = vmatpush1.xpose.msra.mxu0 %v1226
        %1230 = vmatprep.subr.mxu0 0.0
        %1231 = vmatpush1.xpose.msra.mxu0 0.0
        %1232 = vmatprep.subr.mxu0 0.0
        %1233 = vmatpush1.xpose.msra.mxu0 0.0
        %1234 = vmatprep.subr.mxu0 0.0
        %1235 = vmatpush1.xpose.msra.mxu0 0.0
        %1236 = vmatprep.subr.mxu0 0.0
        %1237 = vmatpush1.xpose.msra.mxu0 0.0
        %1238 = vmatprep.subr.mxu0 0.0
        %1239 = vmatpush1.xpose.msra.mxu0 0.0
        %1240 = vmatprep.subr.mxu0 0.0
        %1241 = vmatpush1.xpose.msra.mxu0 0.0
        %1242 = vmatprep.subr.mxu0 0.0
        %1243 = vmatpush1.xpose.msra.mxu0 0.0
        %1244 = vmatprep.subr.mxu0 0.0
        %1245 = vmatpush1.xpose.msra.mxu0 0.0
        %1246 = vmatprep.subr.mxu0 0.0
        %1247 = vmatpush1.xpose.msra.mxu0 0.0
        %1248 = vmatprep.subr.mxu0 0.0
        %1249 = vmatpush1.xpose.msra.mxu0 0.0
        %1250 = vmatprep.subr.mxu0 0.0
        %1251 = vmatpush1.xpose.msra.mxu0 0.0
        %1252 = vmatprep.subr.mxu0 0.0
        %1253 = vmatpush1.xpose.msra.mxu0 0.0
        %1254 = vmatprep.subr.mxu0 0.0
        %1255 = vmatpush1.xpose.msra.mxu0 0.0
        %1256 = vmatprep.subr.mxu0 0.0
        %1257 = vmatpush1.xpose.msra.mxu0 0.0
        %1258 = vmatprep.subr.mxu0 0.0
        %1259 = vmatpush1.xpose.msra.mxu0 0.0
        %1260 = vmatprep.subr.mxu0 0.0
        %1261 = vmatpush1.xpose.msra.mxu0 0.0
        %1262 = vmatprep.subr.mxu0 0.0
        %1263 = vmatpush1.xpose.msra.mxu0 0.0
        %1264 = vmatprep.subr.mxu0 0.0
        %1265 = vmatpush1.xpose.msra.mxu0 0.0
        %1266 = vmatprep.subr.mxu0 0.0
        %1267 = vmatpush1.xpose.msra.mxu0 0.0
        %1268 = vmatprep.subr.mxu0 0.0
        %1269 = vmatpush1.xpose.msra.mxu0 0.0
        %1270 = vmatprep.subr.mxu0 0.0
        %1271 = vmatpush1.xpose.msra.mxu0 0.0
        %1272 = vmatprep.subr.mxu0 0.0
        %1273 = vmatpush1.xpose.msra.mxu0 0.0
        %1274 = vmatprep.subr.mxu0 0.0
        %1275 = vmatpush1.xpose.msra.mxu0 0.0
        %1276 = vmatprep.subr.mxu0 0.0
        %1277 = vmatpush1.xpose.msra.mxu0 0.0
        %1278 = vmatprep.subr.mxu0 0.0
        %1279 = vmatpush1.xpose.msra.mxu0 0.0
        %1280 = vmatprep.subr.mxu0 0.0
        %1281 = vmatpush1.xpose.msra.mxu0 0.0
        %1282 = vmatprep.subr.mxu0 0.0
        %1283 = vmatpush1.xpose.msra.mxu0 0.0
        %1284 = vmatprep.subr.mxu0 0.0
        %1285 = vmatpush1.xpose.msra.mxu0 0.0
        %1286 = vmatprep.subr.mxu0 0.0
        %1287 = vmatpush1.xpose.msra.mxu0 0.0
        %1288 = vmatprep.subr.mxu0 0.0
        %1289 = vmatpush1.xpose.msra.mxu0 0.0
        %1290 = vmatprep.subr.mxu0 0.0
        %1291 = vmatpush1.xpose.msra.mxu0 0.0
        %1292 = vmatprep.mubr.f32.mxu0 0.0
        %1293 = vmatmul.mubr.f32.gmra.mrb[0].mxu0 %v1224
        %v1294 = vpop.f32.mrb[0].mxu0
        %v1295 = vadd.f32 %v648, %v1294
        %v1296 = vpop.f32.mrb[0].mxu0
        %1297 = vdwg.mxu0
        %s1298 = scalar_lea.vmem [#allocation3], 24
        %v1299 = vld [vmem:[%s1298] sm:$0xff]
        %v1300 = vsel %vm650, %v1295, -inf
        %1301 = vmax.xlane.f32.xlu0 %v1300
        %v1302 = vpop.xlane.xlu0 %1301
        %v1303 = vmax.f32 %v1299, %v1302
        %v1304 = vsub.f32 %v1299, %v1303
        %v1305 = vmul.f32 %v1304, 1.442695
        %v1306 = vpow.pop %v1305
        %1308 = vset.pattern.permute.xlu0 0
        %1309 = vperm.xlu0 %1308, %v1303
        %v1310 = vpop.permute.xlu0 %1309
        %v1312 = vsub.f32 %v1295, %v1310
        %v1313 = vmul.f32 %v1312, 1.442695
        %v1314 = vpow.pop %v1313
        %s1315 = scalar_lea.vmem [#allocation4], 24
        %v1316 = vld [vmem:[%s1315] sm:$0xff]
        %v1317 = vmul.f32 %v1306, %v1316
        %v1318 = vsel %vm650, %v1314, 0.0
        %1319 = vadd.xlane.f32.xlu0 %v1318
        %v1320 = vpop.xlane.xlu0 %1319
        %v1321 = vadd.f32 %v1317, %v1320
        %1322 = vst.msk [vmem:[%s1315] sm:$0xff] %vm749, %v1321
        %s1323 = scalar_lea.vmem [#allocation5], 24
        %v1324 = vld [vmem:[%s1323] sm:$0xff]
        %1326 = vset.pattern.permute.xlu0 0
        %1327 = vperm.xlu0 %1326, %v1306
        %v1328 = vpop.permute.xlu0 %1327
        %v1330 = vmul.f32 %v1328, %v1324
        %1331 = vrot.lane.b32.xlu0 %v634, 72
        %v1332 = vpop.permute.xlu0 %1331
        %v1335 = vsel %vm650, %v1314, 0
        %1337 = vmatprep.subr.mxu0 0.0
        %1338 = vmatpush1.msra.mxu0 %v1332
        %1339 = vmatprep.subr.mxu0 0.0
        %1340 = vmatpush1.msra.mxu0 0.0
        %1341 = vmatprep.subr.mxu0 0.0
        %1342 = vmatpush1.msra.mxu0 0.0
        %1343 = vmatprep.subr.mxu0 0.0
        %1344 = vmatpush1.msra.mxu0 0.0
        %1345 = vmatprep.subr.mxu0 0.0
        %1346 = vmatpush1.msra.mxu0 0.0
        %1347 = vmatprep.subr.mxu0 0.0
        %1348 = vmatpush1.msra.mxu0 0.0
        %1349 = vmatprep.subr.mxu0 0.0
        %1350 = vmatpush1.msra.mxu0 0.0
        %1351 = vmatprep.subr.mxu0 0.0
        %1352 = vmatpush1.msra.mxu0 0.0
        %1353 = vmatprep.subr.mxu0 0.0
        %1354 = vmatpush1.msra.mxu0 0.0
        %1355 = vmatprep.subr.mxu0 0.0
        %1356 = vmatpush1.msra.mxu0 0.0
        %1357 = vmatprep.subr.mxu0 0.0
        %1358 = vmatpush1.msra.mxu0 0.0
        %1359 = vmatprep.subr.mxu0 0.0
        %1360 = vmatpush1.msra.mxu0 0.0
        %1361 = vmatprep.subr.mxu0 0.0
        %1362 = vmatpush1.msra.mxu0 0.0
        %1363 = vmatprep.subr.mxu0 0.0
        %1364 = vmatpush1.msra.mxu0 0.0
        %1365 = vmatprep.subr.mxu0 0.0
        %1366 = vmatpush1.msra.mxu0 0.0
        %1367 = vmatprep.subr.mxu0 0.0
        %1368 = vmatpush1.msra.mxu0 0.0
        %1369 = vmatprep.subr.mxu0 0.0
        %1370 = vmatpush1.msra.mxu0 0.0
        %1371 = vmatprep.subr.mxu0 0.0
        %1372 = vmatpush1.msra.mxu0 0.0
        %1373 = vmatprep.subr.mxu0 0.0
        %1374 = vmatpush1.msra.mxu0 0.0
        %1375 = vmatprep.subr.mxu0 0.0
        %1376 = vmatpush1.msra.mxu0 0.0
        %1377 = vmatprep.subr.mxu0 0.0
        %1378 = vmatpush1.msra.mxu0 0.0
        %1379 = vmatprep.subr.mxu0 0.0
        %1380 = vmatpush1.msra.mxu0 0.0
        %1381 = vmatprep.subr.mxu0 0.0
        %1382 = vmatpush1.msra.mxu0 0.0
        %1383 = vmatprep.subr.mxu0 0.0
        %1384 = vmatpush1.msra.mxu0 0.0
        %1385 = vmatprep.subr.mxu0 0.0
        %1386 = vmatpush1.msra.mxu0 0.0
        %1387 = vmatprep.subr.mxu0 0.0
        %1388 = vmatpush1.msra.mxu0 0.0
        %1389 = vmatprep.subr.mxu0 0.0
        %1390 = vmatpush1.msra.mxu0 0.0
        %1391 = vmatprep.subr.mxu0 0.0
        %1392 = vmatpush1.msra.mxu0 0.0
        %1393 = vmatprep.subr.mxu0 0.0
        %1394 = vmatpush1.msra.mxu0 0.0
        %1395 = vmatprep.subr.mxu0 0.0
        %1396 = vmatpush1.msra.mxu0 0.0
        %1397 = vmatprep.subr.mxu0 0.0
        %1398 = vmatpush1.msra.mxu0 0.0
        %1399 = vmatprep.subr.mxu0 0.0
        %1400 = vmatpush1.msra.mxu0 0.0
        %1401 = vmatprep.mubr.f32.mxu0 0.0
        %1402 = vmatmul.mubr.f32.gmra.mrb[0].mxu0 %v1335
        %v1403 = vpop.f32.mrb[0].mxu0
        %v1404 = vadd.f32 0.0, %v1403
        %v1405 = vpop.f32.mrb[0].mxu0
        %1406 = vdwg.mxu0
        %v1407 = vadd.f32 %v1330, %v1404
        %1408 = vst.msk [vmem:[%s1323] sm:$0xff] %vm650, %v1407
        %1409 = vst.msk [vmem:[%s1298] sm:$0xff] %vm749, %v1303
        %p1410 = scmp.eq.s32.totalorder %s36, 1
        // Predicated region
        $region77: #{tpu_custom_call.1} parent=51 // pred_check
          %p1411 = pneg %p1410
        $region78: #{tpu_custom_call.1} parent=51 // pred_check_branch
          %1413 = sbr.rel (%p1411) target = $region80
        $region79: #{tpu_custom_call.1} parent=51 // pred_region
          %v1414 = vld [vmem:[%s7] sm:$0x1]
          %v1415 = vld [vmem:[#allocation5] sm:$0xff]
          %v1416 = vld [vmem:[#allocation4] sm:$0xff]
          %v1417 = vrcp.pop %v1416
          %1419 = vset.pattern.permute.xlu0 0
          %1420 = vperm.xlu0 %1419, %v1417
          %v1421 = vpop.permute.xlu0 %1420
          %v1423 = vmul.f32 %v1415, %v1421
          %v1424 = vld [vmem:[#allocation14] sm:$0xff]
          %v1426 = vsel %vm650, %v1423, 0
          %1428 = vmatprep.subr.mxu0 0.0
          %1429 = vmatpush1.msra.mxu0 %v1424
          %1430 = vmatprep.subr.mxu0 0.0
          %1431 = vmatpush1.msra.mxu0 0.0
          %1432 = vmatprep.subr.mxu0 0.0
          %1433 = vmatpush1.msra.mxu0 0.0
          %1434 = vmatprep.subr.mxu0 0.0
          %1435 = vmatpush1.msra.mxu0 0.0
          %1436 = vmatprep.subr.mxu0 0.0
          %1437 = vmatpush1.msra.mxu0 0.0
          %1438 = vmatprep.subr.mxu0 0.0
          %1439 = vmatpush1.msra.mxu0 0.0
          %1440 = vmatprep.subr.mxu0 0.0
          %1441 = vmatpush1.msra.mxu0 0.0
          %1442 = vmatprep.subr.mxu0 0.0
          %1443 = vmatpush1.msra.mxu0 0.0
          %1444 = vmatprep.subr.mxu0 0.0
          %1445 = vmatpush1.msra.mxu0 0.0
          %1446 = vmatprep.subr.mxu0 0.0
          %1447 = vmatpush1.msra.mxu0 0.0
          %1448 = vmatprep.subr.mxu0 0.0
          %1449 = vmatpush1.msra.mxu0 0.0
          %1450 = vmatprep.subr.mxu0 0.0
          %1451 = vmatpush1.msra.mxu0 0.0
          %1452 = vmatprep.subr.mxu0 0.0
          %1453 = vmatpush1.msra.mxu0 0.0
          %1454 = vmatprep.subr.mxu0 0.0
          %1455 = vmatpush1.msra.mxu0 0.0
          %1456 = vmatprep.subr.mxu0 0.0
          %1457 = vmatpush1.msra.mxu0 0.0
          %1458 = vmatprep.subr.mxu0 0.0
          %1459 = vmatpush1.msra.mxu0 0.0
          %1460 = vmatprep.subr.mxu0 0.0
          %1461 = vmatpush1.msra.mxu0 0.0
          %1462 = vmatprep.subr.mxu0 0.0
          %1463 = vmatpush1.msra.mxu0 0.0
          %1464 = vmatprep.subr.mxu0 0.0
          %1465 = vmatpush1.msra.mxu0 0.0
          %1466 = vmatprep.subr.mxu0 0.0
          %1467 = vmatpush1.msra.mxu0 0.0
          %1468 = vmatprep.subr.mxu0 0.0
          %1469 = vmatpush1.msra.mxu0 0.0
          %1470 = vmatprep.subr.mxu0 0.0
          %1471 = vmatpush1.msra.mxu0 0.0
          %1472 = vmatprep.subr.mxu0 0.0
          %1473 = vmatpush1.msra.mxu0 0.0
          %1474 = vmatprep.subr.mxu0 0.0
          %1475 = vmatpush1.msra.mxu0 0.0
          %1476 = vmatprep.subr.mxu0 0.0
          %1477 = vmatpush1.msra.mxu0 0.0
          %1478 = vmatprep.subr.mxu0 0.0
          %1479 = vmatpush1.msra.mxu0 0.0
          %1480 = vmatprep.subr.mxu0 0.0
          %1481 = vmatpush1.msra.mxu0 0.0
          %1482 = vmatprep.subr.mxu0 0.0
          %1483 = vmatpush1.msra.mxu0 0.0
          %1484 = vmatprep.subr.mxu0 0.0
          %1485 = vmatpush1.msra.mxu0 0.0
          %1486 = vmatprep.subr.mxu0 0.0
          %1487 = vmatpush1.msra.mxu0 0.0
          %1488 = vmatprep.subr.mxu0 0.0
          %1489 = vmatpush1.msra.mxu0 0.0
          %1490 = vmatprep.subr.mxu0 0.0
          %1491 = vmatpush1.msra.mxu0 0.0
          %1492 = vmatprep.mubr.f32.mxu0 0.0
          %1493 = vmatmul.mubr.f32.gmra.mrb[0].mxu0 %v1426
          %v1494 = vpop.f32.mrb[0].mxu0
          %v1495 = vadd.f32 0.0, %v1494
          %v1496 = vpop.f32.mrb[0].mxu0
          %1497 = vdwg.mxu0
          %v1499 = vlaneseq
          %v1500 = vshrl.u32 %v1499, 7
          %v1501 = vsub.s32 0, %v1500
          %v1502 = vrot.slane %v1414, %v1501
          %v1504 = vadd.f32 %v1502, %v1495
          %v1505 = vld [vmem:[%s941] sm:$0xff]
          %v1506 = vld [vmem:[%s933] sm:$0xff]
          %v1507 = vrcp.pop %v1506
          %1509 = vset.pattern.permute.xlu0 0
          %1510 = vperm.xlu0 %1509, %v1507
          %v1511 = vpop.permute.xlu0 %1510
          %v1513 = vmul.f32 %v1505, %v1511
          %s1514 = scalar_lea.vmem [#allocation14], 8
          %v1515 = vld [vmem:[%s1514] sm:$0xff]
          %v1517 = vsel %vm650, %v1513, 0
          %1519 = vmatprep.subr.mxu0 0.0
          %1520 = vmatpush1.msra.mxu0 %v1515
          %1521 = vmatprep.subr.mxu0 0.0
          %1522 = vmatpush1.msra.mxu0 0.0
          %1523 = vmatprep.subr.mxu0 0.0
          %1524 = vmatpush1.msra.mxu0 0.0
          %1525 = vmatprep.subr.mxu0 0.0
          %1526 = vmatpush1.msra.mxu0 0.0
          %1527 = vmatprep.subr.mxu0 0.0
          %1528 = vmatpush1.msra.mxu0 0.0
          %1529 = vmatprep.subr.mxu0 0.0
          %1530 = vmatpush1.msra.mxu0 0.0
          %1531 = vmatprep.subr.mxu0 0.0
          %1532 = vmatpush1.msra.mxu0 0.0
          %1533 = vmatprep.subr.mxu0 0.0
          %1534 = vmatpush1.msra.mxu0 0.0
          %1535 = vmatprep.subr.mxu0 0.0
          %1536 = vmatpush1.msra.mxu0 0.0
          %1537 = vmatprep.subr.mxu0 0.0
          %1538 = vmatpush1.msra.mxu0 0.0
          %1539 = vmatprep.subr.mxu0 0.0
          %1540 = vmatpush1.msra.mxu0 0.0
          %1541 = vmatprep.subr.mxu0 0.0
          %1542 = vmatpush1.msra.mxu0 0.0
          %1543 = vmatprep.subr.mxu0 0.0
          %1544 = vmatpush1.msra.mxu0 0.0
          %1545 = vmatprep.subr.mxu0 0.0
          %1546 = vmatpush1.msra.mxu0 0.0
          %1547 = vmatprep.subr.mxu0 0.0
          %1548 = vmatpush1.msra.mxu0 0.0
          %1549 = vmatprep.subr.mxu0 0.0
          %1550 = vmatpush1.msra.mxu0 0.0
          %1551 = vmatprep.subr.mxu0 0.0
          %1552 = vmatpush1.msra.mxu0 0.0
          %1553 = vmatprep.subr.mxu0 0.0
          %1554 = vmatpush1.msra.mxu0 0.0
          %1555 = vmatprep.subr.mxu0 0.0
          %1556 = vmatpush1.msra.mxu0 0.0
          %1557 = vmatprep.subr.mxu0 0.0
          %1558 = vmatpush1.msra.mxu0 0.0
          %1559 = vmatprep.subr.mxu0 0.0
          %1560 = vmatpush1.msra.mxu0 0.0
          %1561 = vmatprep.subr.mxu0 0.0
          %1562 = vmatpush1.msra.mxu0 0.0
          %1563 = vmatprep.subr.mxu0 0.0
          %1564 = vmatpush1.msra.mxu0 0.0
          %1565 = vmatprep.subr.mxu0 0.0
          %1566 = vmatpush1.msra.mxu0 0.0
          %1567 = vmatprep.subr.mxu0 0.0
          %1568 = vmatpush1.msra.mxu0 0.0
          %1569 = vmatprep.subr.mxu0 0.0
          %1570 = vmatpush1.msra.mxu0 0.0
          %1571 = vmatprep.subr.mxu0 0.0
          %1572 = vmatpush1.msra.mxu0 0.0
          %1573 = vmatprep.subr.mxu0 0.0
          %1574 = vmatpush1.msra.mxu0 0.0
          %1575 = vmatprep.subr.mxu0 0.0
          %1576 = vmatpush1.msra.mxu0 0.0
          %1577 = vmatprep.subr.mxu0 0.0
          %1578 = vmatpush1.msra.mxu0 0.0
          %1579 = vmatprep.subr.mxu0 0.0
          %1580 = vmatpush1.msra.mxu0 0.0
          %1581 = vmatprep.subr.mxu0 0.0
          %1582 = vmatpush1.msra.mxu0 0.0
          %1583 = vmatprep.mubr.f32.mxu0 0.0
          %1584 = vmatmul.mubr.f32.gmra.mrb[0].mxu0 %v1517
          %v1585 = vpop.f32.mrb[0].mxu0
          %v1586 = vadd.f32 0.0, %v1585
          %v1587 = vpop.f32.mrb[0].mxu0
          %1588 = vdwg.mxu0
          %v1589 = vadd.f32 %v1504, %v1586
          %v1590 = vld [vmem:[%s1132] sm:$0xff]
          %v1591 = vld [vmem:[%s1124] sm:$0xff]
          %v1592 = vrcp.pop %v1591
          %1594 = vset.pattern.permute.xlu0 0
          %1595 = vperm.xlu0 %1594, %v1592
          %v1596 = vpop.permute.xlu0 %1595
          %v1598 = vmul.f32 %v1590, %v1596
          %s1599 = scalar_lea.vmem [#allocation14], 16
          %v1600 = vld [vmem:[%s1599] sm:$0xff]
          %v1602 = vsel %vm650, %v1598, 0
          %1604 = vmatprep.subr.mxu0 0.0
          %1605 = vmatpush1.msra.mxu0 %v1600
          %1606 = vmatprep.subr.mxu0 0.0
          %1607 = vmatpush1.msra.mxu0 0.0
          %1608 = vmatprep.subr.mxu0 0.0
          %1609 = vmatpush1.msra.mxu0 0.0
          %1610 = vmatprep.subr.mxu0 0.0
          %1611 = vmatpush1.msra.mxu0 0.0
          %1612 = vmatprep.subr.mxu0 0.0
          %1613 = vmatpush1.msra.mxu0 0.0
          %1614 = vmatprep.subr.mxu0 0.0
          %1615 = vmatpush1.msra.mxu0 0.0
          %1616 = vmatprep.subr.mxu0 0.0
          %1617 = vmatpush1.msra.mxu0 0.0
          %1618 = vmatprep.subr.mxu0 0.0
          %1619 = vmatpush1.msra.mxu0 0.0
          %1620 = vmatprep.subr.mxu0 0.0
          %1621 = vmatpush1.msra.mxu0 0.0
          %1622 = vmatprep.subr.mxu0 0.0
          %1623 = vmatpush1.msra.mxu0 0.0
          %1624 = vmatprep.subr.mxu0 0.0
          %1625 = vmatpush1.msra.mxu0 0.0
          %1626 = vmatprep.subr.mxu0 0.0
          %1627 = vmatpush1.msra.mxu0 0.0
          %1628 = vmatprep.subr.mxu0 0.0
          %1629 = vmatpush1.msra.mxu0 0.0
          %1630 = vmatprep.subr.mxu0 0.0
          %1631 = vmatpush1.msra.mxu0 0.0
          %1632 = vmatprep.subr.mxu0 0.0
          %1633 = vmatpush1.msra.mxu0 0.0
          %1634 = vmatprep.subr.mxu0 0.0
          %1635 = vmatpush1.msra.mxu0 0.0
          %1636 = vmatprep.subr.mxu0 0.0
          %1637 = vmatpush1.msra.mxu0 0.0
          %1638 = vmatprep.subr.mxu0 0.0
          %1639 = vmatpush1.msra.mxu0 0.0
          %1640 = vmatprep.subr.mxu0 0.0
          %1641 = vmatpush1.msra.mxu0 0.0
          %1642 = vmatprep.subr.mxu0 0.0
          %1643 = vmatpush1.msra.mxu0 0.0
          %1644 = vmatprep.subr.mxu0 0.0
          %1645 = vmatpush1.msra.mxu0 0.0
          %1646 = vmatprep.subr.mxu0 0.0
          %1647 = vmatpush1.msra.mxu0 0.0
          %1648 = vmatprep.subr.mxu0 0.0
          %1649 = vmatpush1.msra.mxu0 0.0
          %1650 = vmatprep.subr.mxu0 0.0
          %1651 = vmatpush1.msra.mxu0 0.0
          %1652 = vmatprep.subr.mxu0 0.0
          %1653 = vmatpush1.msra.mxu0 0.0
          %1654 = vmatprep.subr.mxu0 0.0
          %1655 = vmatpush1.msra.mxu0 0.0
          %1656 = vmatprep.subr.mxu0 0.0
          %1657 = vmatpush1.msra.mxu0 0.0
          %1658 = vmatprep.subr.mxu0 0.0
          %1659 = vmatpush1.msra.mxu0 0.0
          %1660 = vmatprep.subr.mxu0 0.0
          %1661 = vmatpush1.msra.mxu0 0.0
          %1662 = vmatprep.subr.mxu0 0.0
          %1663 = vmatpush1.msra.mxu0 0.0
          %1664 = vmatprep.subr.mxu0 0.0
          %1665 = vmatpush1.msra.mxu0 0.0
          %1666 = vmatprep.subr.mxu0 0.0
          %1667 = vmatpush1.msra.mxu0 0.0
          %1668 = vmatprep.mubr.f32.mxu0 0.0
          %1669 = vmatmul.mubr.f32.gmra.mrb[0].mxu0 %v1602
          %v1670 = vpop.f32.mrb[0].mxu0
          %v1671 = vadd.f32 0.0, %v1670
          %v1672 = vpop.f32.mrb[0].mxu0
          %1673 = vdwg.mxu0
          %v1674 = vadd.f32 %v1589, %v1671
          %v1675 = vld [vmem:[%s1323] sm:$0xff]
          %v1676 = vld [vmem:[%s1315] sm:$0xff]
          %v1677 = vrcp.pop %v1676
          %1679 = vset.pattern.permute.xlu0 0
          %1680 = vperm.xlu0 %1679, %v1677
          %v1681 = vpop.permute.xlu0 %1680
          %v1683 = vmul.f32 %v1675, %v1681
          %s1684 = scalar_lea.vmem [#allocation14], 24
          %v1685 = vld [vmem:[%s1684] sm:$0xff]
          %v1687 = vsel %vm650, %v1683, 0
          %1689 = vmatprep.subr.mxu0 0.0
          %1690 = vmatpush1.msra.mxu0 %v1685
          %1691 = vmatprep.subr.mxu0 0.0
          %1692 = vmatpush1.msra.mxu0 0.0
          %1693 = vmatprep.subr.mxu0 0.0
          %1694 = vmatpush1.msra.mxu0 0.0
          %1695 = vmatprep.subr.mxu0 0.0
          %1696 = vmatpush1.msra.mxu0 0.0
          %1697 = vmatprep.subr.mxu0 0.0
          %1698 = vmatpush1.msra.mxu0 0.0
          %1699 = vmatprep.subr.mxu0 0.0
          %1700 = vmatpush1.msra.mxu0 0.0
          %1701 = vmatprep.subr.mxu0 0.0
          %1702 = vmatpush1.msra.mxu0 0.0
          %1703 = vmatprep.subr.mxu0 0.0
          %1704 = vmatpush1.msra.mxu0 0.0
          %1705 = vmatprep.subr.mxu0 0.0
          %1706 = vmatpush1.msra.mxu0 0.0
          %1707 = vmatprep.subr.mxu0 0.0
          %1708 = vmatpush1.msra.mxu0 0.0
          %1709 = vmatprep.subr.mxu0 0.0
          %1710 = vmatpush1.msra.mxu0 0.0
          %1711 = vmatprep.subr.mxu0 0.0
          %1712 = vmatpush1.msra.mxu0 0.0
          %1713 = vmatprep.subr.mxu0 0.0
          %1714 = vmatpush1.msra.mxu0 0.0
          %1715 = vmatprep.subr.mxu0 0.0
          %1716 = vmatpush1.msra.mxu0 0.0
          %1717 = vmatprep.subr.mxu0 0.0
          %1718 = vmatpush1.msra.mxu0 0.0
          %1719 = vmatprep.subr.mxu0 0.0
          %1720 = vmatpush1.msra.mxu0 0.0
          %1721 = vmatprep.subr.mxu0 0.0
          %1722 = vmatpush1.msra.mxu0 0.0
          %1723 = vmatprep.subr.mxu0 0.0
          %1724 = vmatpush1.msra.mxu0 0.0
          %1725 = vmatprep.subr.mxu0 0.0
          %1726 = vmatpush1.msra.mxu0 0.0
          %1727 = vmatprep.subr.mxu0 0.0
          %1728 = vmatpush1.msra.mxu0 0.0
          %1729 = vmatprep.subr.mxu0 0.0
          %1730 = vmatpush1.msra.mxu0 0.0
          %1731 = vmatprep.subr.mxu0 0.0
          %1732 = vmatpush1.msra.mxu0 0.0
          %1733 = vmatprep.subr.mxu0 0.0
          %1734 = vmatpush1.msra.mxu0 0.0
          %1735 = vmatprep.subr.mxu0 0.0
          %1736 = vmatpush1.msra.mxu0 0.0
          %1737 = vmatprep.subr.mxu0 0.0
          %1738 = vmatpush1.msra.mxu0 0.0
          %1739 = vmatprep.subr.mxu0 0.0
          %1740 = vmatpush1.msra.mxu0 0.0
          %1741 = vmatprep.subr.mxu0 0.0
          %1742 = vmatpush1.msra.mxu0 0.0
          %1743 = vmatprep.subr.mxu0 0.0
          %1744 = vmatpush1.msra.mxu0 0.0
          %1745 = vmatprep.subr.mxu0 0.0
          %1746 = vmatpush1.msra.mxu0 0.0
          %1747 = vmatprep.subr.mxu0 0.0
          %1748 = vmatpush1.msra.mxu0 0.0
          %1749 = vmatprep.subr.mxu0 0.0
          %1750 = vmatpush1.msra.mxu0 0.0
          %1751 = vmatprep.subr.mxu0 0.0
          %1752 = vmatpush1.msra.mxu0 0.0
          %1753 = vmatprep.mubr.f32.mxu0 0.0
          %1754 = vmatmul.mubr.f32.gmra.mrb[0].mxu0 %v1687
          %v1755 = vpop.f32.mrb[0].mxu0
          %v1756 = vadd.f32 0.0, %v1755
          %v1757 = vpop.f32.mrb[0].mxu0
          %1758 = vdwg.mxu0
          %v1759 = vadd.f32 %v1674, %v1756
          %1760 = vst.msk [vmem:[%s429] sm:$0xff] %vm563, %v1759
        $region80: #{tpu_custom_call.1} parent=51 // pred_fallthru
          _
        %s1761 = sand.u32 %s240, 1
        %s1762 = scalar_lea.sflag [#allocation8], %s1761
        %s1763 = sand.u32 %s240, 1
        %s1764 = smul.addr %s1763, 8
        %s1765 = scalar_lea.vmem [#allocation15], %s1764
        // Predicated region
        $region81: #{tpu_custom_call.1} parent=51 // pred_check
          %p1766 = pneg %p250
        $region82: #{tpu_custom_call.1} parent=51 // pred_check_branch
          %1768 = sbr.rel (%p1766) target = $region84
        $region83: #{tpu_custom_call.1} parent=51 // pred_region
          %s1770 = ssub.s32 128, 128
          %1771 = vsyncadd %s1762, %s1770
          %s1772 = smul.addr %s34, 2
          %s1773 = sadd.s32 %s35, %s1772
          %s1774 = smul.addr %s1773, 128
          %s1775 = scalar_lea.hbm %s8, %s1774
          %s1777 = sshll.u32 %s1765, 4
          %s1778 = int_to_ptr.vmem [resolvable:$true] %s1777
          %1780 = dma.vmem_to_hbm [thread:$0]  %s1778, 128, %s1775, %s1762
        $region84: #{tpu_custom_call.1} parent=51 // pred_fallthru
          _
      $region52: #{tpu_custom_call.1} parent=5 // pred_fallthru
        _
      %p1781 = scmp.le.s32.totalorder 2, %s24
      // Predicated region
      $region85: #{tpu_custom_call.1} parent=5 // pred_check
        %p1782 = pneg %p1781
      $region86: #{tpu_custom_call.1} parent=5 // pred_check_branch
        %1784 = sbr.rel (%p1782) target = $region88
      $region87: #{tpu_custom_call.1} parent=5 // pred_region
        %s1785 = ssub.s32 %s24, 2
        // Predicated region
        $region89: #{tpu_custom_call.1} parent=87 // pred_check
          %p1786 = pneg %p256
        $region90: #{tpu_custom_call.1} parent=87 // pred_check_branch
          %1788 = sbr.rel (%p1786) target = $region92
        $region91: #{tpu_custom_call.1} parent=87 // pred_region
          %s1789 = sand.u32 %s241, 1
          %s1790 = scalar_lea.sflag [#allocation8], %s1789
          %s1791 = sand.u32 %s241, 1
          %s1792 = smul.addr %s1791, 8
          %s1793 = scalar_lea.vmem [#allocation15], %s1792
          %1794 = dma.done %s1790, 128
        $region92: #{tpu_custom_call.1} parent=87 // pred_fallthru
          _
      $region88: #{tpu_custom_call.1} parent=5 // pred_fallthru
        _
    $region6: #{tpu_custom_call.1} parent=1 // loop_footer
      %s28 = sadd.s32 1, %s24
    $region7: #{tpu_custom_call.1} parent=1 // loop_footer_branch
      %23 = sbr.rel target = $region3
    $region8: #{tpu_custom_call.1} parent=1 // loop_exit
      _
    %1795 = vsyncpa [#allocation7], 1
    %s1796 = scalar_lea.sflag [#allocation7], 1
    %1797 = vsyncpa %s1796, 1
    %1798 = vsyncpa [#allocation10], 1
    %s1799 = scalar_lea.sflag [#allocation10], 1
    %1800 = vsyncpa %s1799, 1
    %1801 = vsyncpa [#allocation13], 1
    %1802 = vsyncpa [#allocation8], 1
    %s1803 = scalar_lea.sflag [#allocation8], 1
    %1804 = vsyncpa %s1803, 1

</llo_original>
